<compile_context>
chip_gen: v7x
topology: tpu7x:2x2x1
jax: 0.10.0
libtpu: 0.0.40
codegen_flags: <defaults>
</compile_context>

<pallas_src>
import functools

import jax
import jax.numpy as jnp
from jax import lax
from jax.experimental import pallas as pl
from jax.experimental.pallas import tpu as pltpu


def _hardswish(x):
    return x * jnp.clip(x + 3.0, 0.0, 6.0) * (1.0 / 6.0)


# ---------------------------------------------------------------------------
# Fused kernel: expand(1x1)+BN+HS -> depthwise KxK+BN+HS -> channel SE ->
#               project(1x1)+BN -> +residual.  One grid step == one image.
# Working layout is channel-major: activations are (C, H*W) with H*W on lanes.
# BN scales are pre-folded into the conv weights; only biases are added here.
# ---------------------------------------------------------------------------
def _fused_inverted_residual_kernel(
    x_ref,        # (1, Cin, HW)    io_dtype
    wexp_ref,     # (Cexp, Cin)     io_dtype   (s_exp * w_exp^T)
    bexp_ref,     # (Cexp, 1)       f32        folded BN bias
    wdw_ref,      # (Cexp, K*K)     f32        (s_dw * depthwise taps) as columns
    bdw_ref,      # (Cexp, 1)       f32
    mask_ref,     # (K*K, HW)       f32        per-tap zero-padding validity
    w1_ref,       # (Cexp, S)       f32        SE fc1
    b1_ref,       # (1, S)          f32
    w2t_ref,      # (Cexp, S)       f32        SE fc2^T
    b2_ref,       # (Cexp, 1)       f32
    wproj_ref,    # (Cout, Cexp)    io_dtype   (s_proj * w_proj^T)
    bproj_ref,    # (Cout, 1)       f32
    o_ref,        # (1, Cout, HW)   io_dtype
    slab_ref,     # (Cexp, HW + 2*PADF) f32    VMEM scratch (padded flat image)
    *, K, W, HW, PADF, pad, use_res,
):
    f32 = jnp.float32
    x = x_ref[0].astype(f32)                                    # (Cin, HW)

    # ---- 1) 1x1 expand conv + folded BN + Hardswish (MXU, lane-dense columns)
    y = jnp.dot(wexp_ref[...].astype(f32), x, preferred_element_type=f32)
    y = _hardswish(y + bexp_ref[...])                           # (Cexp, HW)

    # ---- 2) depthwise KxK conv + folded BN + Hardswish
    # Write the expanded activation once into a zero-padded flat-lane slab; the
    # interior store is 128-lane aligned (PADF is a multiple of 128).  Each tap
    # is then a statically shifted lane window (compiler lowers the misaligned
    # window to XLU lane rotations), masked where the flat shift would cross a
    # row / image boundary, times the per-channel tap weight (column broadcast).
    # Only the two padding strips need clearing each step (keeps masked reads
    # finite); the interior is fully overwritten.
    if PADF > 0:
        zpad = jnp.zeros((slab_ref.shape[0], PADF), f32)
        slab_ref[:, :PADF] = zpad
        slab_ref[:, PADF + HW:] = zpad
    slab_ref[:, PADF:PADF + HW] = y

    wdw = wdw_ref[...]                                          # (Cexp, K*K)
    masks = mask_ref[...]                                       # (K*K, HW)
    acc = jnp.zeros_like(y)
    for kh in range(K):
        for kw in range(K):
            t = kh * K + kw
            d = (kh - pad) * W + (kw - pad)                     # flat pixel shift
            tap = slab_ref[:, PADF + d: PADF + d + HW]          # (Cexp, HW)
            acc = acc + tap * wdw[:, t:t + 1] * masks[t:t + 1, :]
    y = _hardswish(acc + bdw_ref[...])                          # (Cexp, HW)

    # ---- 3) channel squeeze-excitation, fused (VPU/XLU/EUP only, no MXU)
    m = jnp.mean(y, axis=1, keepdims=True)                      # (Cexp, 1) lane-reduce
    h = jnp.sum(m * w1_ref[...], axis=0, keepdims=True) + b1_ref[...]   # (1, S)
    h = jnp.maximum(h, 0.0)                                     # ReLU
    z = jnp.sum(h * w2t_ref[...], axis=1, keepdims=True) + b2_ref[...]  # (Cexp, 1)
    gate = 1.0 / (1.0 + jnp.exp(-z))                            # Sigmoid (EUP)
    y = y * gate                                                # rescale

    # ---- 4) 1x1 project conv + folded BN (+ residual)
    out = jnp.dot(wproj_ref[...].astype(f32), y, preferred_element_type=f32)
    out = out + bproj_ref[...]                                  # (Cout, HW)
    if use_res:
        out = out + x
    o_ref[0] = out.astype(o_ref.dtype)


# ---------------------------------------------------------------------------
# Wrapper: NCHW in / NCHW out (no transposes, only free contiguous reshapes).
# ---------------------------------------------------------------------------
def inverted_residual_forward(x_nchw, p, *, K=3, io_dtype=jnp.float32):
    N, Cin, H, W = x_nchw.shape
    Cexp = p["w_exp"].shape[1]
    Cout = p["w_proj"].shape[1]
    S = p["w1"].shape[1]
    HW = H * W
    pad = (K - 1) // 2
    # padding (in flat-lane units) for the depthwise slab, rounded to 128 so
    # the interior store is lane-aligned.
    PADF = -(-(pad * (W + 1)) // 128) * 128 if pad > 0 else 0
    f32 = jnp.float32
    use_res = (Cin == Cout)   # stride == 1 for this block configuration

    x_flat = x_nchw.reshape(N, Cin, HW).astype(io_dtype)        # NCHW is already channel-major

    # One-time weight layout prep (tiny, host/XLA side).  Fold the BN scales
    # directly into the conv weights so the kernel only does bias adds.
    col = lambda v: v.reshape(-1, 1).astype(f32)
    wexp_t = (p["s_exp"][:, None] * jnp.transpose(p["w_exp"])).astype(io_dtype)   # (Cexp, Cin)
    wproj_t = (p["s_proj"][:, None] * jnp.transpose(p["w_proj"])).astype(io_dtype)  # (Cout, Cexp)
    wdw_cols = (p["s_dw"][:, None] *
                p["w_dw"].reshape(K * K, Cexp).T).astype(f32)   # (Cexp, K*K)

    bexp, bdw, bproj = col(p["b_exp"]), col(p["b_dw"]), col(p["b_proj"])
    w1 = p["w1"].astype(f32)                                    # (Cexp, S)
    b1 = p["b1"].reshape(1, S).astype(f32)
    w2t = jnp.transpose(p["w2"]).astype(f32)                    # (Cexp, S)
    b2 = col(p["b2"])

    # Per-tap validity masks: 1 where the shifted flat tap corresponds to a real
    # in-image neighbour, 0 where zero padding applies (or the flat shift would
    # wrap across a row).
    hh = jnp.arange(H).reshape(H, 1)
    ww = jnp.arange(W).reshape(1, W)
    mask_rows = []
    for kh in range(K):
        for kw in range(K):
            dh, dw = kh - pad, kw - pad
            valid = ((hh + dh >= 0) & (hh + dh < H) &
                     (ww + dw >= 0) & (ww + dw < W))
            mask_rows.append(valid.reshape(HW))
    mask = jnp.stack(mask_rows, axis=0).astype(f32)             # (K*K, HW)

    kernel = functools.partial(
        _fused_inverted_residual_kernel,
        K=K, W=W, HW=HW, PADF=PADF, pad=pad, use_res=use_res)

    def full2d(shape):
        return pl.BlockSpec(shape, lambda n: (0, 0))

    out_flat = pl.pallas_call(
        kernel,
        out_shape=jax.ShapeDtypeStruct((N, Cout, HW), io_dtype),
        grid_spec=pltpu.PrefetchScalarGridSpec(
            num_scalar_prefetch=0,
            grid=(N,),
            in_specs=[
                pl.BlockSpec((1, Cin, HW), lambda n: (n, 0, 0)),
                full2d((Cexp, Cin)),
                full2d((Cexp, 1)),
                full2d((Cexp, K * K)),
                full2d((Cexp, 1)),
                full2d((K * K, HW)),
                full2d((Cexp, S)), full2d((1, S)),
                full2d((Cexp, S)), full2d((Cexp, 1)),
                full2d((Cout, Cexp)),
                full2d((Cout, 1)),
            ],
            out_specs=pl.BlockSpec((1, Cout, HW), lambda n: (n, 0, 0)),
            scratch_shapes=[pltpu.VMEM((Cexp, HW + 2 * PADF), jnp.float32)],
        ),
        compiler_params=pltpu.CompilerParams(
            dimension_semantics=("parallel",)),
    )(x_flat, wexp_t, bexp, wdw_cols, bdw, mask,
      w1, b1, w2t, b2, wproj_t, bproj)

    return out_flat.reshape(N, Cout, H, W)


# ---------------------------------------------------------------------------
# Pure-JAX reference (NCHW) for correctness checking.
# ---------------------------------------------------------------------------
def reference_nchw(x, p, *, Cexp):
    y = jnp.einsum("nchw,ce->nehw", x, p["w_exp"])
    y = y * p["s_exp"][None, :, None, None] + p["b_exp"][None, :, None, None]
    y = _hardswish(y)

    w = jnp.transpose(p["w_dw"], (2, 0, 1))[:, None, :, :]      # (Cexp,1,K,K)
    y = lax.conv_general_dilated(
        y, w, window_strides=(1, 1), padding=((1, 1), (1, 1)),
        dimension_numbers=("NCHW", "OIHW", "NCHW"), feature_group_count=Cexp,
    )
    y = y * p["s_dw"][None, :, None, None] + p["b_dw"][None, :, None, None]
    y = _hardswish(y)

    m = jnp.mean(y, axis=(2, 3))                                # (N, Cexp)
    h = jnp.maximum(m @ p["w1"] + p["b1"], 0.0)
    s = jax.nn.sigmoid(h @ p["w2"] + p["b2"])
    y = y * s[:, :, None, None]

    z = jnp.einsum("nehw,eo->nohw", y, p["w_proj"])
    z = z * p["s_proj"][None, :, None, None] + p["b_proj"][None, :, None, None]
    return z + x


def _fold_bn(gamma, beta, mean, var, eps=1e-5):
    scale = gamma / jnp.sqrt(var + eps)
    return scale, beta - mean * scale


def make_params(key, Cin, Cexp, Cout, K, S_se):
    ks = jax.random.split(key, 16)
    f32 = jnp.float32

    def bn(k):
        k1, k2, k3, k4 = jax.random.split(k, 4)
        gamma = jax.random.uniform(k1, (Cexp,), f32, 0.5, 1.5)
        beta = 0.1 * jax.random.normal(k2, (Cexp,), f32)
        mean = 0.1 * jax.random.normal(k3, (Cexp,), f32)
        var = jax.random.uniform(k4, (Cexp,), f32, 0.5, 1.5)
        return _fold_bn(gamma, beta, mean, var)

    s_exp, b_exp = bn(ks[0])
    s_dw, b_dw = bn(ks[1])
    gamma = jax.random.uniform(ks[2], (Cout,), f32, 0.5, 1.5)
    beta = 0.1 * jax.random.normal(ks[3], (Cout,), f32)
    mean = 0.1 * jax.random.normal(ks[4], (Cout,), f32)
    var = jax.random.uniform(ks[5], (Cout,), f32, 0.5, 1.5)
    s_proj, b_proj = _fold_bn(gamma, beta, mean, var)

    return dict(
        w_exp=0.2 * jax.random.normal(ks[6], (Cin, Cexp), f32),
        s_exp=s_exp, b_exp=b_exp,
        w_dw=0.2 * jax.random.normal(ks[7], (K, K, Cexp), f32),
        s_dw=s_dw, b_dw=b_dw,
        w1=0.2 * jax.random.normal(ks[8], (Cexp, S_se), f32),
        b1=0.1 * jax.random.normal(ks[9], (S_se,), f32),
        w2=0.2 * jax.random.normal(ks[10], (S_se, Cexp), f32),
        b2=0.1 * jax.random.normal(ks[11], (Cexp,), f32),
        w_proj=0.2 * jax.random.normal(ks[12], (Cexp, Cout), f32),
        s_proj=s_proj, b_proj=b_proj,
    )


if __name__ == "__main__":
    N, Cin, H, W = 2, 16, 16, 16
    Cexp, Cout, K, S_se = 32, 16, 3, 8   # make_divisible(32 // 4, 8) == 8

    key = jax.random.PRNGKey(0)
    kx, kp = jax.random.split(key)
    x = jax.random.normal(kx, (N, Cin, H, W), jnp.float32)
    params = make_params(kp, Cin, Cexp, Cout, K, S_se)

    ref = reference_nchw(x, params, Cexp=Cexp)

    # f32 I/O path.
    out = inverted_residual_forward(x, params, K=K)
    out = jax.block_until_ready(out)
    assert out.shape == (N, Cout, H, W)
    assert jnp.allclose(out, ref, atol=2e-4, rtol=2e-4), (
        float(jnp.max(jnp.abs(out - ref)))
    )

    # bf16 storage path (v6e/v7x HBM-traffic saver; in-kernel math stays f32).
    out_bf16 = inverted_residual_forward(x, params, K=K, io_dtype=jnp.bfloat16)
    out_bf16 = jax.block_until_ready(out_bf16).astype(jnp.float32)
    assert jnp.allclose(out_bf16, ref, atol=0.2, rtol=0.2), (
        float(jnp.max(jnp.abs(out_bf16 - ref)))
    )

    print("KERNEL_OK")
</pallas_src>

<mosaic_0001>
module attributes {stable_mosaic.version = 11 : i64} {
  func.func @_fused_inverted_residual_kernel(%arg0: i32, %arg1: memref<1x16x256xf32, #tpu.memory_space<vmem>>, %arg2: memref<32x16xf32, #tpu.memory_space<vmem>>, %arg3: memref<32x1xf32, #tpu.memory_space<vmem>>, %arg4: memref<32x9xf32, #tpu.memory_space<vmem>>, %arg5: memref<32x1xf32, #tpu.memory_space<vmem>>, %arg6: memref<9x256xf32, #tpu.memory_space<vmem>>, %arg7: memref<32x8xf32, #tpu.memory_space<vmem>>, %arg8: memref<1x8xf32, #tpu.memory_space<vmem>>, %arg9: memref<32x8xf32, #tpu.memory_space<vmem>>, %arg10: memref<32x1xf32, #tpu.memory_space<vmem>>, %arg11: memref<16x32xf32, #tpu.memory_space<vmem>>, %arg12: memref<16x1xf32, #tpu.memory_space<vmem>>, %arg13: memref<1x16x256xf32, #tpu.memory_space<vmem>>, %arg14: memref<32x512xf32, #tpu.memory_space<vmem>>) attributes {dimension_semantics = [#tpu.dimension_semantics<parallel>], iteration_bounds = array<i64: 2>, scalar_prefetch = 0 : i64, scratch_operands = 1 : i64, tpu.core_type = #tpu.core_type<tc>, window_params = [{transform_indices = @transform_0, window_bounds = array<i64: 1, 16, 256>}, {pipeline_mode = #tpu.pipeline_mode<synchronous>, transform_indices = @transform_1, window_bounds = array<i64: 32, 16>}, {pipeline_mode = #tpu.pipeline_mode<synchronous>, transform_indices = @transform_2, window_bounds = array<i64: 32, 1>}, {pipeline_mode = #tpu.pipeline_mode<synchronous>, transform_indices = @transform_3, window_bounds = array<i64: 32, 9>}, {pipeline_mode = #tpu.pipeline_mode<synchronous>, transform_indices = @transform_4, window_bounds = array<i64: 32, 1>}, {pipeline_mode = #tpu.pipeline_mode<synchronous>, transform_indices = @transform_5, window_bounds = array<i64: 9, 256>}, {pipeline_mode = #tpu.pipeline_mode<synchronous>, transform_indices = @transform_6, window_bounds = array<i64: 32, 8>}, {pipeline_mode = #tpu.pipeline_mode<synchronous>, transform_indices = @transform_7, window_bounds = array<i64: 1, 8>}, {pipeline_mode = #tpu.pipeline_mode<synchronous>, transform_indices = @transform_8, window_bounds = array<i64: 32, 8>}, {pipeline_mode = #tpu.pipeline_mode<synchronous>, transform_indices = @transform_9, window_bounds = array<i64: 32, 1>}, {pipeline_mode = #tpu.pipeline_mode<synchronous>, transform_indices = @transform_10, window_bounds = array<i64: 16, 32>}, {pipeline_mode = #tpu.pipeline_mode<synchronous>, transform_indices = @transform_11, window_bounds = array<i64: 16, 1>}, {transform_indices = @transform_12, window_bounds = array<i64: 1, 16, 256>}]} {
    %c0 = arith.constant 0 : index
    %c0_0 = arith.constant 0 : index
    %c0_1 = arith.constant 0 : index
    %0 = vector.load %arg1[%c0, %c0_0, %c0_1] : memref<1x16x256xf32, #tpu.memory_space<vmem>>, vector<1x16x256xf32>
    %1 = vector.shape_cast %0 : vector<1x16x256xf32> to vector<16x256xf32>
    %c0_2 = arith.constant 0 : index
    %c0_3 = arith.constant 0 : index
    %2 = vector.load %arg2[%c0_2, %c0_3] : memref<32x16xf32, #tpu.memory_space<vmem>>, vector<32x16xf32>
    %cst = arith.constant dense<0.000000e+00> : vector<32x256xf32>
    %3 = tpu.matmul %2, %1, %cst {dimension_numbers = #tpu.dot_dimension_numbers<[1], [0], [0], [1], [0, 0, 1, 1], [], []>} : vector<32x16xf32>, vector<16x256xf32>, vector<32x256xf32> -> vector<32x256xf32>
    %c0_4 = arith.constant 0 : index
    %c0_5 = arith.constant 0 : index
    %4 = vector.load %arg3[%c0_4, %c0_5] : memref<32x1xf32, #tpu.memory_space<vmem>>, vector<32x1xf32>
    %5 = vector.broadcast %4 : vector<32x1xf32> to vector<32x256xf32>
    %6 = arith.addf %3, %5 : vector<32x256xf32>
    %cst_6 = arith.constant 3.000000e+00 : f32
    %7 = vector.broadcast %cst_6 : f32 to vector<32x256xf32>
    %8 = arith.addf %6, %7 : vector<32x256xf32>
    %cst_7 = arith.constant 0.000000e+00 : f32
    %cst_8 = arith.constant 6.000000e+00 : f32
    %9 = vector.broadcast %cst_7 : f32 to vector<32x256xf32>
    %10 = arith.maximumf %9, %8 : vector<32x256xf32>
    %11 = vector.broadcast %cst_8 : f32 to vector<32x256xf32>
    %12 = arith.minimumf %11, %10 : vector<32x256xf32>
    %13 = arith.mulf %6, %12 : vector<32x256xf32>
    %cst_9 = arith.constant 0.166666672 : f32
    %14 = vector.broadcast %cst_9 : f32 to vector<32x256xf32>
    %15 = arith.mulf %13, %14 : vector<32x256xf32>
    %cst_10 = arith.constant 0.000000e+00 : f32
    %16 = vector.broadcast %cst_10 : f32 to vector<32x128xf32>
    %c0_11 = arith.constant 0 : index
    %c0_12 = arith.constant 0 : index
    %17 = vector.load %arg14[%c0_11, %c0_12] : memref<32x512xf32, #tpu.memory_space<vmem>>, vector<32x128xf32>
    tpu.vector_store %arg14[%c0_11, %c0_12], %16 {strides = array<i32>} : memref<32x512xf32, #tpu.memory_space<vmem>>, vector<32x128xf32>,
    %c0_13 = arith.constant 0 : index
    %c384 = arith.constant 384 : index
    %18 = vector.load %arg14[%c0_13, %c384] : memref<32x512xf32, #tpu.memory_space<vmem>>, vector<32x128xf32>
    tpu.vector_store %arg14[%c0_13, %c384], %16 {strides = array<i32>} : memref<32x512xf32, #tpu.memory_space<vmem>>, vector<32x128xf32>,
    %c0_14 = arith.constant 0 : index
    %c128 = arith.constant 128 : index
    %19 = vector.load %arg14[%c0_14, %c128] : memref<32x512xf32, #tpu.memory_space<vmem>>, vector<32x256xf32>
    tpu.vector_store %arg14[%c0_14, %c128], %15 {strides = array<i32>} : memref<32x512xf32, #tpu.memory_space<vmem>>, vector<32x256xf32>,
    %c0_15 = arith.constant 0 : index
    %c0_16 = arith.constant 0 : index
    %20 = vector.load %arg4[%c0_15, %c0_16] : memref<32x9xf32, #tpu.memory_space<vmem>>, vector<32x9xf32>
    %c0_17 = arith.constant 0 : index
    %c0_18 = arith.constant 0 : index
    %21 = vector.load %arg6[%c0_17, %c0_18] : memref<9x256xf32, #tpu.memory_space<vmem>>, vector<9x256xf32>
    %cst_19 = arith.constant 0.000000e+00 : f32
    %22 = vector.broadcast %cst_19 : f32 to vector<32x256xf32>
    %c0_20 = arith.constant 0 : index
    %c111 = arith.constant 111 : index
    %23 = vector.load %arg14[%c0_20, %c111] : memref<32x512xf32, #tpu.memory_space<vmem>>, vector<32x256xf32>
    %24 = vector.extract_strided_slice %20 {offsets = [0, 0], sizes = [32, 1], strides = [1, 1]} : vector<32x9xf32> to vector<32x1xf32>
    %25 = vector.broadcast %24 : vector<32x1xf32> to vector<32x256xf32>
    %26 = arith.mulf %23, %25 : vector<32x256xf32>
    %27 = vector.extract_strided_slice %21 {offsets = [0, 0], sizes = [1, 256], strides = [1, 1]} : vector<9x256xf32> to vector<1x256xf32>
    %28 = vector.broadcast %27 : vector<1x256xf32> to vector<32x256xf32>
    %29 = arith.mulf %26, %28 : vector<32x256xf32>
    %30 = arith.addf %22, %29 : vector<32x256xf32>
    %c0_21 = arith.constant 0 : index
    %c112 = arith.constant 112 : index
    %31 = vector.load %arg14[%c0_21, %c112] : memref<32x512xf32, #tpu.memory_space<vmem>>, vector<32x256xf32>
    %32 = vector.extract_strided_slice %20 {offsets = [0, 1], sizes = [32, 1], strides = [1, 1]} : vector<32x9xf32> to vector<32x1xf32>
    %33 = vector.broadcast %32 : vector<32x1xf32> to vector<32x256xf32>
    %34 = arith.mulf %31, %33 : vector<32x256xf32>
    %35 = vector.extract_strided_slice %21 {offsets = [1, 0], sizes = [1, 256], strides = [1, 1]} : vector<9x256xf32> to vector<1x256xf32>
    %36 = vector.broadcast %35 : vector<1x256xf32> to vector<32x256xf32>
    %37 = arith.mulf %34, %36 : vector<32x256xf32>
    %38 = arith.addf %30, %37 : vector<32x256xf32>
    %c0_22 = arith.constant 0 : index
    %c113 = arith.constant 113 : index
    %39 = vector.load %arg14[%c0_22, %c113] : memref<32x512xf32, #tpu.memory_space<vmem>>, vector<32x256xf32>
    %40 = vector.extract_strided_slice %20 {offsets = [0, 2], sizes = [32, 1], strides = [1, 1]} : vector<32x9xf32> to vector<32x1xf32>
    %41 = vector.broadcast %40 : vector<32x1xf32> to vector<32x256xf32>
    %42 = arith.mulf %39, %41 : vector<32x256xf32>
    %43 = vector.extract_strided_slice %21 {offsets = [2, 0], sizes = [1, 256], strides = [1, 1]} : vector<9x256xf32> to vector<1x256xf32>
    %44 = vector.broadcast %43 : vector<1x256xf32> to vector<32x256xf32>
    %45 = arith.mulf %42, %44 : vector<32x256xf32>
    %46 = arith.addf %38, %45 : vector<32x256xf32>
    %c0_23 = arith.constant 0 : index
    %c127 = arith.constant 127 : index
    %47 = vector.load %arg14[%c0_23, %c127] : memref<32x512xf32, #tpu.memory_space<vmem>>, vector<32x256xf32>
    %48 = vector.extract_strided_slice %20 {offsets = [0, 3], sizes = [32, 1], strides = [1, 1]} : vector<32x9xf32> to vector<32x1xf32>
    %49 = vector.broadcast %48 : vector<32x1xf32> to vector<32x256xf32>
    %50 = arith.mulf %47, %49 : vector<32x256xf32>
    %51 = vector.extract_strided_slice %21 {offsets = [3, 0], sizes = [1, 256], strides = [1, 1]} : vector<9x256xf32> to vector<1x256xf32>
    %52 = vector.broadcast %51 : vector<1x256xf32> to vector<32x256xf32>
    %53 = arith.mulf %50, %52 : vector<32x256xf32>
    %54 = arith.addf %46, %53 : vector<32x256xf32>
    %c0_24 = arith.constant 0 : index
    %c128_25 = arith.constant 128 : index
    %55 = vector.load %arg14[%c0_24, %c128_25] : memref<32x512xf32, #tpu.memory_space<vmem>>, vector<32x256xf32>
    %56 = vector.extract_strided_slice %20 {offsets = [0, 4], sizes = [32, 1], strides = [1, 1]} : vector<32x9xf32> to vector<32x1xf32>
    %57 = vector.broadcast %56 : vector<32x1xf32> to vector<32x256xf32>
    %58 = arith.mulf %55, %57 : vector<32x256xf32>
    %59 = vector.extract_strided_slice %21 {offsets = [4, 0], sizes = [1, 256], strides = [1, 1]} : vector<9x256xf32> to vector<1x256xf32>
    %60 = vector.broadcast %59 : vector<1x256xf32> to vector<32x256xf32>
    %61 = arith.mulf %58, %60 : vector<32x256xf32>
    %62 = arith.addf %54, %61 : vector<32x256xf32>
    %c0_26 = arith.constant 0 : index
    %c129 = arith.constant 129 : index
    %63 = vector.load %arg14[%c0_26, %c129] : memref<32x512xf32, #tpu.memory_space<vmem>>, vector<32x256xf32>
    %64 = vector.extract_strided_slice %20 {offsets = [0, 5], sizes = [32, 1], strides = [1, 1]} : vector<32x9xf32> to vector<32x1xf32>
    %65 = vector.broadcast %64 : vector<32x1xf32> to vector<32x256xf32>
    %66 = arith.mulf %63, %65 : vector<32x256xf32>
    %67 = vector.extract_strided_slice %21 {offsets = [5, 0], sizes = [1, 256], strides = [1, 1]} : vector<9x256xf32> to vector<1x256xf32>
    %68 = vector.broadcast %67 : vector<1x256xf32> to vector<32x256xf32>
    %69 = arith.mulf %66, %68 : vector<32x256xf32>
    %70 = arith.addf %62, %69 : vector<32x256xf32>
    %c0_27 = arith.constant 0 : index
    %c143 = arith.constant 143 : index
    %71 = vector.load %arg14[%c0_27, %c143] : memref<32x512xf32, #tpu.memory_space<vmem>>, vector<32x256xf32>
    %72 = vector.extract_strided_slice %20 {offsets = [0, 6], sizes = [32, 1], strides = [1, 1]} : vector<32x9xf32> to vector<32x1xf32>
    %73 = vector.broadcast %72 : vector<32x1xf32> to vector<32x256xf32>
    %74 = arith.mulf %71, %73 : vector<32x256xf32>
    %75 = vector.extract_strided_slice %21 {offsets = [6, 0], sizes = [1, 256], strides = [1, 1]} : vector<9x256xf32> to vector<1x256xf32>
    %76 = vector.broadcast %75 : vector<1x256xf32> to vector<32x256xf32>
    %77 = arith.mulf %74, %76 : vector<32x256xf32>
    %78 = arith.addf %70, %77 : vector<32x256xf32>
    %c0_28 = arith.constant 0 : index
    %c144 = arith.constant 144 : index
    %79 = vector.load %arg14[%c0_28, %c144] : memref<32x512xf32, #tpu.memory_space<vmem>>, vector<32x256xf32>
    %80 = vector.extract_strided_slice %20 {offsets = [0, 7], sizes = [32, 1], strides = [1, 1]} : vector<32x9xf32> to vector<32x1xf32>
    %81 = vector.broadcast %80 : vector<32x1xf32> to vector<32x256xf32>
    %82 = arith.mulf %79, %81 : vector<32x256xf32>
    %83 = vector.extract_strided_slice %21 {offsets = [7, 0], sizes = [1, 256], strides = [1, 1]} : vector<9x256xf32> to vector<1x256xf32>
    %84 = vector.broadcast %83 : vector<1x256xf32> to vector<32x256xf32>
    %85 = arith.mulf %82, %84 : vector<32x256xf32>
    %86 = arith.addf %78, %85 : vector<32x256xf32>
    %c0_29 = arith.constant 0 : index
    %c145 = arith.constant 145 : index
    %87 = vector.load %arg14[%c0_29, %c145] : memref<32x512xf32, #tpu.memory_space<vmem>>, vector<32x256xf32>
    %88 = vector.extract_strided_slice %20 {offsets = [0, 8], sizes = [32, 1], strides = [1, 1]} : vector<32x9xf32> to vector<32x1xf32>
    %89 = vector.broadcast %88 : vector<32x1xf32> to vector<32x256xf32>
    %90 = arith.mulf %87, %89 : vector<32x256xf32>
    %91 = vector.extract_strided_slice %21 {offsets = [8, 0], sizes = [1, 256], strides = [1, 1]} : vector<9x256xf32> to vector<1x256xf32>
    %92 = vector.broadcast %91 : vector<1x256xf32> to vector<32x256xf32>
    %93 = arith.mulf %90, %92 : vector<32x256xf32>
    %94 = arith.addf %86, %93 : vector<32x256xf32>
    %c0_30 = arith.constant 0 : index
    %c0_31 = arith.constant 0 : index
    %95 = vector.load %arg5[%c0_30, %c0_31] : memref<32x1xf32, #tpu.memory_space<vmem>>, vector<32x1xf32>
    %96 = vector.broadcast %95 : vector<32x1xf32> to vector<32x256xf32>
    %97 = arith.addf %94, %96 : vector<32x256xf32>
    %cst_32 = arith.constant 3.000000e+00 : f32
    %98 = vector.broadcast %cst_32 : f32 to vector<32x256xf32>
    %99 = arith.addf %97, %98 : vector<32x256xf32>
    %cst_33 = arith.constant 0.000000e+00 : f32
    %cst_34 = arith.constant 6.000000e+00 : f32
    %100 = vector.broadcast %cst_33 : f32 to vector<32x256xf32>
    %101 = arith.maximumf %100, %99 : vector<32x256xf32>
    %102 = vector.broadcast %cst_34 : f32 to vector<32x256xf32>
    %103 = arith.minimumf %102, %101 : vector<32x256xf32>
    %104 = arith.mulf %97, %103 : vector<32x256xf32>
    %cst_35 = arith.constant 0.166666672 : f32
    %105 = vector.broadcast %cst_35 : f32 to vector<32x256xf32>
    %106 = arith.mulf %104, %105 : vector<32x256xf32>
    %cst_36 = arith.constant dense<0.000000e+00> : vector<32xf32>
    %107 = vector.multi_reduction <add>, %106, %cst_36 [1] : vector<32x256xf32> to vector<32xf32>
    %108 = vector.shape_cast %107 : vector<32xf32> to vector<32x1xf32>
    %cst_37 = arith.constant 2.560000e+02 : f32
    %109 = vector.broadcast %cst_37 : f32 to vector<32x1xf32>
    %110 = arith.divf %108, %109 : vector<32x1xf32>
    %c0_38 = arith.constant 0 : index
    %c0_39 = arith.constant 0 : index
    %111 = vector.load %arg7[%c0_38, %c0_39] : memref<32x8xf32, #tpu.memory_space<vmem>>, vector<32x8xf32>
    %112 = vector.broadcast %110 : vector<32x1xf32> to vector<32x8xf32>
    %113 = arith.mulf %112, %111 : vector<32x8xf32>
    %cst_40 = arith.constant dense<0.000000e+00> : vector<8xf32>
    %114 = vector.multi_reduction <add>, %113, %cst_40 [0] : vector<32x8xf32> to vector<8xf32>
    %115 = vector.shape_cast %114 : vector<8xf32> to vector<1x8xf32>
    %c0_41 = arith.constant 0 : index
    %c0_42 = arith.constant 0 : index
    %116 = vector.load %arg8[%c0_41, %c0_42] : memref<1x8xf32, #tpu.memory_space<vmem>>, vector<1x8xf32>
    %117 = arith.addf %115, %116 : vector<1x8xf32>
    %cst_43 = arith.constant 0.000000e+00 : f32
    %118 = vector.broadcast %cst_43 : f32 to vector<1x8xf32>
    %119 = arith.maximumf %117, %118 : vector<1x8xf32>
    %c0_44 = arith.constant 0 : index
    %c0_45 = arith.constant 0 : index
    %120 = vector.load %arg9[%c0_44, %c0_45] : memref<32x8xf32, #tpu.memory_space<vmem>>, vector<32x8xf32>
    %121 = vector.broadcast %119 : vector<1x8xf32> to vector<32x8xf32>
    %122 = arith.mulf %121, %120 : vector<32x8xf32>
    %cst_46 = arith.constant dense<0.000000e+00> : vector<32xf32>
    %123 = vector.multi_reduction <add>, %122, %cst_46 [1] : vector<32x8xf32> to vector<32xf32>
    %124 = vector.shape_cast %123 : vector<32xf32> to vector<32x1xf32>
    %c0_47 = arith.constant 0 : index
    %c0_48 = arith.constant 0 : index
    %125 = vector.load %arg10[%c0_47, %c0_48] : memref<32x1xf32, #tpu.memory_space<vmem>>, vector<32x1xf32>
    %126 = arith.addf %124, %125 : vector<32x1xf32>
    %cst_49 = arith.constant 0.000000e+00 : f32
    %127 = vector.broadcast %cst_49 : f32 to vector<32x1xf32>
    %128 = arith.subf %127, %126 : vector<32x1xf32>
    %129 = math.exp %128 : vector<32x1xf32>
    %cst_50 = arith.constant 1.000000e+00 : f32
    %130 = vector.broadcast %cst_50 : f32 to vector<32x1xf32>
    %131 = arith.addf %130, %129 : vector<32x1xf32>
    %cst_51 = arith.constant 1.000000e+00 : f32
    %132 = vector.broadcast %cst_51 : f32 to vector<32x1xf32>
    %133 = arith.divf %132, %131 : vector<32x1xf32>
    %134 = vector.broadcast %133 : vector<32x1xf32> to vector<32x256xf32>
    %135 = arith.mulf %106, %134 : vector<32x256xf32>
    %c0_52 = arith.constant 0 : index
    %c0_53 = arith.constant 0 : index
    %136 = vector.load %arg11[%c0_52, %c0_53] : memref<16x32xf32, #tpu.memory_space<vmem>>, vector<16x32xf32>
    %cst_54 = arith.constant dense<0.000000e+00> : vector<16x256xf32>
    %137 = tpu.matmul %136, %135, %cst_54 {dimension_numbers = #tpu.dot_dimension_numbers<[1], [0], [0], [1], [0, 0, 1, 1], [], []>} : vector<16x32xf32>, vector<32x256xf32>, vector<16x256xf32> -> vector<16x256xf32>
    %c0_55 = arith.constant 0 : index
    %c0_56 = arith.constant 0 : index
    %138 = vector.load %arg12[%c0_55, %c0_56] : memref<16x1xf32, #tpu.memory_space<vmem>>, vector<16x1xf32>
    %139 = vector.broadcast %138 : vector<16x1xf32> to vector<16x256xf32>
    %140 = arith.addf %137, %139 : vector<16x256xf32>
    %141 = arith.addf %140, %1 : vector<16x256xf32>
    %c0_57 = arith.constant 0 : index
    %c0_58 = arith.constant 0 : index
    %c0_59 = arith.constant 0 : index
    %142 = vector.load %arg13[%c0_57, %c0_58, %c0_59] : memref<1x16x256xf32, #tpu.memory_space<vmem>>, vector<1x16x256xf32>
    %143 = vector.shape_cast %142 : vector<1x16x256xf32> to vector<16x256xf32>
    %144 = vector.shape_cast %141 : vector<16x256xf32> to vector<1x16x256xf32>
    tpu.vector_store %arg13[%c0_57, %c0_58, %c0_59], %144 {strides = array<i32>} : memref<1x16x256xf32, #tpu.memory_space<vmem>>, vector<1x16x256xf32>,
    return
  }
  func.func @transform_0(%arg0: i32) -> (i32, i32, i32) {
    %c0_i32 = arith.constant 0 : i32
    %c0_i32_0 = arith.constant 0 : i32
    %c0_i32_1 = arith.constant 0 : i32
    return %arg0, %c0_i32, %c0_i32_0 : i32, i32, i32
  }
  func.func @transform_1(%arg0: i32) -> (i32, i32) {
    %c0_i32 = arith.constant 0 : i32
    %c0_i32_0 = arith.constant 0 : i32
    %c0_i32_1 = arith.constant 0 : i32
    return %c0_i32, %c0_i32_0 : i32, i32
  }
  func.func @transform_2(%arg0: i32) -> (i32, i32) {
    %c0_i32 = arith.constant 0 : i32
    %c0_i32_0 = arith.constant 0 : i32
    %c0_i32_1 = arith.constant 0 : i32
    return %c0_i32, %c0_i32_0 : i32, i32
  }
  func.func @transform_3(%arg0: i32) -> (i32, i32) {
    %c0_i32 = arith.constant 0 : i32
    %c0_i32_0 = arith.constant 0 : i32
    %c0_i32_1 = arith.constant 0 : i32
    return %c0_i32, %c0_i32_0 : i32, i32
  }
  func.func @transform_4(%arg0: i32) -> (i32, i32) {
    %c0_i32 = arith.constant 0 : i32
    %c0_i32_0 = arith.constant 0 : i32
    %c0_i32_1 = arith.constant 0 : i32
    return %c0_i32, %c0_i32_0 : i32, i32
  }
  func.func @transform_5(%arg0: i32) -> (i32, i32) {
    %c0_i32 = arith.constant 0 : i32
    %c0_i32_0 = arith.constant 0 : i32
    %c0_i32_1 = arith.constant 0 : i32
    return %c0_i32, %c0_i32_0 : i32, i32
  }
  func.func @transform_6(%arg0: i32) -> (i32, i32) {
    %c0_i32 = arith.constant 0 : i32
    %c0_i32_0 = arith.constant 0 : i32
    %c0_i32_1 = arith.constant 0 : i32
    return %c0_i32, %c0_i32_0 : i32, i32
  }
  func.func @transform_7(%arg0: i32) -> (i32, i32) {
    %c0_i32 = arith.constant 0 : i32
    %c0_i32_0 = arith.constant 0 : i32
    %c0_i32_1 = arith.constant 0 : i32
    return %c0_i32, %c0_i32_0 : i32, i32
  }
  func.func @transform_8(%arg0: i32) -> (i32, i32) {
    %c0_i32 = arith.constant 0 : i32
    %c0_i32_0 = arith.constant 0 : i32
    %c0_i32_1 = arith.constant 0 : i32
    return %c0_i32, %c0_i32_0 : i32, i32
  }
  func.func @transform_9(%arg0: i32) -> (i32, i32) {
    %c0_i32 = arith.constant 0 : i32
    %c0_i32_0 = arith.constant 0 : i32
    %c0_i32_1 = arith.constant 0 : i32
    return %c0_i32, %c0_i32_0 : i32, i32
  }
  func.func @transform_10(%arg0: i32) -> (i32, i32) {
    %c0_i32 = arith.constant 0 : i32
    %c0_i32_0 = arith.constant 0 : i32
    %c0_i32_1 = arith.constant 0 : i32
    return %c0_i32, %c0_i32_0 : i32, i32
  }
  func.func @transform_11(%arg0: i32) -> (i32, i32) {
    %c0_i32 = arith.constant 0 : i32
    %c0_i32_0 = arith.constant 0 : i32
    %c0_i32_1 = arith.constant 0 : i32
    return %c0_i32, %c0_i32_0 : i32, i32
  }
  func.func @transform_12(%arg0: i32) -> (i32, i32, i32) {
    %c0_i32 = arith.constant 0 : i32
    %c0_i32_0 = arith.constant 0 : i32
    %c0_i32_1 = arith.constant 0 : i32
    return %arg0, %c0_i32, %c0_i32_0 : i32, i32, i32
  }
}

</mosaic_0001>

<llo_original>
// kernel: tpu_custom_call.1
$region0: #{tpu_custom_call.1}
  #allocation0 [shape = 'u32[]', space=smem, size = 0x4, offset = 0x4, fixed_abs, tag = 'smem constant byte address 0x4 - core index']
  #allocation1 [shape = 'u32[144,128]{1,0:T(1,128)}', space=vmem, size = 0x12000, scoped, tag = 'internal scratch']
  #allocation2 [shape = 'f32[32,512]{1,0:T(8,128)}', space=vmem, size = 0x10000, scoped, tag = 'scratch operand']
  %s0 = inlined_call_operand.vmem [shape: f32[2,16,256], index: 0, kind: input, shape index: {}]
  %s1 = inlined_call_operand.vmem [shape: f32[32,16], index: 1, kind: input, shape index: {}]
  %s2 = inlined_call_operand.vmem [shape: f32[32,1], index: 2, kind: input, shape index: {}]
  %s3 = inlined_call_operand.vmem [shape: f32[32,9], index: 3, kind: input, shape index: {}]
  %s4 = inlined_call_operand.vmem [shape: f32[32,1], index: 4, kind: input, shape index: {}]
  %s5 = inlined_call_operand.vmem [shape: f32[9,256], index: 5, kind: input, shape index: {}]
  %s6 = inlined_call_operand.vmem [shape: f32[32,8], index: 6, kind: input, shape index: {}]
  %s7 = inlined_call_operand.vmem [shape: f32[1,8], index: 7, kind: input, shape index: {}]
  %s8 = inlined_call_operand.vmem [shape: f32[32,8], index: 8, kind: input, shape index: {}]
  %s9 = inlined_call_operand.vmem [shape: f32[32,1], index: 9, kind: input, shape index: {}]
  %s10 = inlined_call_operand.vmem [shape: f32[16,32], index: 10, kind: input, shape index: {}]
  %s11 = inlined_call_operand.vmem [shape: f32[16,1], index: 11, kind: input, shape index: {}]
  %s12 = inlined_call_operand.hbm [shape: f32[2,16,256], index: 12, kind: output, shape index: {}]
  %s13 = sld [smem:[#allocation0]]
  $region81: #{tpu_custom_call.1} parent=0
    _
  %s15 = ssub.s32 1, %s13
  %s16 = scalar_select 0, %s15, %s13
  $region1: #{tpu_custom_call.1} parent=0
    #allocation3 [shape = 'u8[32768]{0}', space=vmem, size = 0x8000, scoped, tag = 'output window, operand 0']
    #allocation4 [shape = 's32[2]{0}', space=sflag, size = 0x8, scoped, tag = 'scoped memory for tpu_custom_call.1']
    %17 = vsyncpa [#allocation4], 0
    %s18 = scalar_lea.sflag [#allocation4], 1
    %19 = vsyncpa %s18, 0
    loop: start=0, step=1, limit=4
    $region2: #{tpu_custom_call.1} parent=1 // loop_pre_header
      _
    $region3: #{tpu_custom_call.1} parent=1 // loop_header
      %s21 = sphi 0, %s25
      %p22 = scmp.ge.s32.totalorder %s21, 4
      %s31 = sphi 0, %s33
      %s34 = sphi 0, %s31
      %s35 = sphi 0, %s34
      %s51 = sphi 0, %s35
      %s55 = sphi 0, %s55
      %s57 = sphi 0, %s55
      %s58 = sphi 0, %s57
      %s72 = sphi 0, %s58
      %s76 = sphi 0, %s76
      %s78 = sphi 0, %s76
      %s79 = sphi 0, %s78
      %s93 = sphi 0, %s79
      %s97 = sphi 0, %s97
      %s99 = sphi 0, %s97
      %s100 = sphi 0, %s99
      %s114 = sphi 0, %s100
      %s118 = sphi 0, %s118
      %s120 = sphi 0, %s118
      %s121 = sphi 0, %s120
      %s135 = sphi 0, %s121
      %s139 = sphi 0, %s139
      %s141 = sphi 0, %s139
      %s142 = sphi 0, %s141
      %s156 = sphi 0, %s142
      %s160 = sphi 0, %s160
      %s162 = sphi 0, %s160
      %s163 = sphi 0, %s162
      %s177 = sphi 0, %s163
      %s181 = sphi 0, %s181
      %s183 = sphi 0, %s181
      %s184 = sphi 0, %s183
      %s198 = sphi 0, %s184
      %s202 = sphi 0, %s202
      %s204 = sphi 0, %s202
      %s205 = sphi 0, %s204
      %s219 = sphi 0, %s205
      %s223 = sphi 0, %s223
      %s225 = sphi 0, %s223
      %s226 = sphi 0, %s225
      %s240 = sphi 0, %s226
      %s244 = sphi 0, %s244
      %s246 = sphi 0, %s244
      %s247 = sphi 0, %s246
      %s261 = sphi 0, %s247
      %s265 = sphi 0, %s265
      %s267 = sphi 0, %s265
      %s268 = sphi 0, %s267
      %s282 = sphi 0, %s268
      %s288 = sphi 0, %s290
      %s291 = sphi 0, %s288
      %s292 = sphi 0, %s291
      %s308 = sphi 0, %s292
    $region4: #{tpu_custom_call.1} parent=1 // loop_header_branch
      %24 = sbr.rel (%p22) target = $region8
    $region5: #{tpu_custom_call.1} parent=1 // loop_body
      %s26 = ssub.s32 %s21, 1
      %s27 = ssub.s32 %s21, 2
      %s28 = sadd.s32 %s21, 1
      %s29 = ssub.s32 %s21, %s28
      %p30 = scmp.eq.s32.totalorder %s29, 0
      %s32 = sadd.s32 %s31, 1
      %s33 = scalar_select %p30, %s31, %s32
      %p36 = pneg %p30
      %p37 = scmp.eq.s32.totalorder %s21, 1
      %p38 = por %p36, %p37
      %p39 = scmp.ne.s32.totalorder %s31, %s34
      %p40 = scmp.eq.s32.totalorder %s21, 0
      %p41 = por %p39, %p40
      %p42 = scmp.ne.s32.totalorder %s31, %s34
      %p43 = scmp.eq.s32.totalorder %s26, 1
      %p44 = por %p42, %p43
      %p45 = scmp.ne.s32.totalorder %s34, %s35
      %p46 = scmp.eq.s32.totalorder %s26, 0
      %p47 = por %p45, %p46
      %p48 = scmp.ne.s32.totalorder %s34, %s35
      %p49 = scmp.eq.s32.totalorder %s27, 1
      %p50 = por %p48, %p49
      %p52 = scmp.ne.s32.totalorder %s35, %s51
      %p53 = scmp.eq.s32.totalorder %s27, 0
      %p54 = por %p52, %p53
      %s56 = sadd.s32 %s55, 1
      %p59 = scmp.eq.s32.totalorder %s21, 1
      %p60 = scmp.ne.s32.totalorder %s55, %s57
      %p61 = scmp.eq.s32.totalorder %s21, 0
      %p62 = por %p60, %p61
      %p63 = scmp.ne.s32.totalorder %s55, %s57
      %p64 = scmp.eq.s32.totalorder %s26, 1
      %p65 = por %p63, %p64
      %p66 = scmp.ne.s32.totalorder %s57, %s58
      %p67 = scmp.eq.s32.totalorder %s26, 0
      %p68 = por %p66, %p67
      %p69 = scmp.ne.s32.totalorder %s57, %s58
      %p70 = scmp.eq.s32.totalorder %s27, 1
      %p71 = por %p69, %p70
      %p73 = scmp.ne.s32.totalorder %s58, %s72
      %p74 = scmp.eq.s32.totalorder %s27, 0
      %p75 = por %p73, %p74
      %s77 = sadd.s32 %s76, 1
      %p80 = scmp.eq.s32.totalorder %s21, 1
      %p81 = scmp.ne.s32.totalorder %s76, %s78
      %p82 = scmp.eq.s32.totalorder %s21, 0
      %p83 = por %p81, %p82
      %p84 = scmp.ne.s32.totalorder %s76, %s78
      %p85 = scmp.eq.s32.totalorder %s26, 1
      %p86 = por %p84, %p85
      %p87 = scmp.ne.s32.totalorder %s78, %s79
      %p88 = scmp.eq.s32.totalorder %s26, 0
      %p89 = por %p87, %p88
      %p90 = scmp.ne.s32.totalorder %s78, %s79
      %p91 = scmp.eq.s32.totalorder %s27, 1
      %p92 = por %p90, %p91
      %p94 = scmp.ne.s32.totalorder %s79, %s93
      %p95 = scmp.eq.s32.totalorder %s27, 0
      %p96 = por %p94, %p95
      %s98 = sadd.s32 %s97, 1
      %p101 = scmp.eq.s32.totalorder %s21, 1
      %p102 = scmp.ne.s32.totalorder %s97, %s99
      %p103 = scmp.eq.s32.totalorder %s21, 0
      %p104 = por %p102, %p103
      %p105 = scmp.ne.s32.totalorder %s97, %s99
      %p106 = scmp.eq.s32.totalorder %s26, 1
      %p107 = por %p105, %p106
      %p108 = scmp.ne.s32.totalorder %s99, %s100
      %p109 = scmp.eq.s32.totalorder %s26, 0
      %p110 = por %p108, %p109
      %p111 = scmp.ne.s32.totalorder %s99, %s100
      %p112 = scmp.eq.s32.totalorder %s27, 1
      %p113 = por %p111, %p112
      %p115 = scmp.ne.s32.totalorder %s100, %s114
      %p116 = scmp.eq.s32.totalorder %s27, 0
      %p117 = por %p115, %p116
      %s119 = sadd.s32 %s118, 1
      %p122 = scmp.eq.s32.totalorder %s21, 1
      %p123 = scmp.ne.s32.totalorder %s118, %s120
      %p124 = scmp.eq.s32.totalorder %s21, 0
      %p125 = por %p123, %p124
      %p126 = scmp.ne.s32.totalorder %s118, %s120
      %p127 = scmp.eq.s32.totalorder %s26, 1
      %p128 = por %p126, %p127
      %p129 = scmp.ne.s32.totalorder %s120, %s121
      %p130 = scmp.eq.s32.totalorder %s26, 0
      %p131 = por %p129, %p130
      %p132 = scmp.ne.s32.totalorder %s120, %s121
      %p133 = scmp.eq.s32.totalorder %s27, 1
      %p134 = por %p132, %p133
      %p136 = scmp.ne.s32.totalorder %s121, %s135
      %p137 = scmp.eq.s32.totalorder %s27, 0
      %p138 = por %p136, %p137
      %s140 = sadd.s32 %s139, 1
      %p143 = scmp.eq.s32.totalorder %s21, 1
      %p144 = scmp.ne.s32.totalorder %s139, %s141
      %p145 = scmp.eq.s32.totalorder %s21, 0
      %p146 = por %p144, %p145
      %p147 = scmp.ne.s32.totalorder %s139, %s141
      %p148 = scmp.eq.s32.totalorder %s26, 1
      %p149 = por %p147, %p148
      %p150 = scmp.ne.s32.totalorder %s141, %s142
      %p151 = scmp.eq.s32.totalorder %s26, 0
      %p152 = por %p150, %p151
      %p153 = scmp.ne.s32.totalorder %s141, %s142
      %p154 = scmp.eq.s32.totalorder %s27, 1
      %p155 = por %p153, %p154
      %p157 = scmp.ne.s32.totalorder %s142, %s156
      %p158 = scmp.eq.s32.totalorder %s27, 0
      %p159 = por %p157, %p158
      %s161 = sadd.s32 %s160, 1
      %p164 = scmp.eq.s32.totalorder %s21, 1
      %p165 = scmp.ne.s32.totalorder %s160, %s162
      %p166 = scmp.eq.s32.totalorder %s21, 0
      %p167 = por %p165, %p166
      %p168 = scmp.ne.s32.totalorder %s160, %s162
      %p169 = scmp.eq.s32.totalorder %s26, 1
      %p170 = por %p168, %p169
      %p171 = scmp.ne.s32.totalorder %s162, %s163
      %p172 = scmp.eq.s32.totalorder %s26, 0
      %p173 = por %p171, %p172
      %p174 = scmp.ne.s32.totalorder %s162, %s163
      %p175 = scmp.eq.s32.totalorder %s27, 1
      %p176 = por %p174, %p175
      %p178 = scmp.ne.s32.totalorder %s163, %s177
      %p179 = scmp.eq.s32.totalorder %s27, 0
      %p180 = por %p178, %p179
      %s182 = sadd.s32 %s181, 1
      %p185 = scmp.eq.s32.totalorder %s21, 1
      %p186 = scmp.ne.s32.totalorder %s181, %s183
      %p187 = scmp.eq.s32.totalorder %s21, 0
      %p188 = por %p186, %p187
      %p189 = scmp.ne.s32.totalorder %s181, %s183
      %p190 = scmp.eq.s32.totalorder %s26, 1
      %p191 = por %p189, %p190
      %p192 = scmp.ne.s32.totalorder %s183, %s184
      %p193 = scmp.eq.s32.totalorder %s26, 0
      %p194 = por %p192, %p193
      %p195 = scmp.ne.s32.totalorder %s183, %s184
      %p196 = scmp.eq.s32.totalorder %s27, 1
      %p197 = por %p195, %p196
      %p199 = scmp.ne.s32.totalorder %s184, %s198
      %p200 = scmp.eq.s32.totalorder %s27, 0
      %p201 = por %p199, %p200
      %s203 = sadd.s32 %s202, 1
      %p206 = scmp.eq.s32.totalorder %s21, 1
      %p207 = scmp.ne.s32.totalorder %s202, %s204
      %p208 = scmp.eq.s32.totalorder %s21, 0
      %p209 = por %p207, %p208
      %p210 = scmp.ne.s32.totalorder %s202, %s204
      %p211 = scmp.eq.s32.totalorder %s26, 1
      %p212 = por %p210, %p211
      %p213 = scmp.ne.s32.totalorder %s204, %s205
      %p214 = scmp.eq.s32.totalorder %s26, 0
      %p215 = por %p213, %p214
      %p216 = scmp.ne.s32.totalorder %s204, %s205
      %p217 = scmp.eq.s32.totalorder %s27, 1
      %p218 = por %p216, %p217
      %p220 = scmp.ne.s32.totalorder %s205, %s219
      %p221 = scmp.eq.s32.totalorder %s27, 0
      %p222 = por %p220, %p221
      %s224 = sadd.s32 %s223, 1
      %p227 = scmp.eq.s32.totalorder %s21, 1
      %p228 = scmp.ne.s32.totalorder %s223, %s225
      %p229 = scmp.eq.s32.totalorder %s21, 0
      %p230 = por %p228, %p229
      %p231 = scmp.ne.s32.totalorder %s223, %s225
      %p232 = scmp.eq.s32.totalorder %s26, 1
      %p233 = por %p231, %p232
      %p234 = scmp.ne.s32.totalorder %s225, %s226
      %p235 = scmp.eq.s32.totalorder %s26, 0
      %p236 = por %p234, %p235
      %p237 = scmp.ne.s32.totalorder %s225, %s226
      %p238 = scmp.eq.s32.totalorder %s27, 1
      %p239 = por %p237, %p238
      %p241 = scmp.ne.s32.totalorder %s226, %s240
      %p242 = scmp.eq.s32.totalorder %s27, 0
      %p243 = por %p241, %p242
      %s245 = sadd.s32 %s244, 1
      %p248 = scmp.eq.s32.totalorder %s21, 1
      %p249 = scmp.ne.s32.totalorder %s244, %s246
      %p250 = scmp.eq.s32.totalorder %s21, 0
      %p251 = por %p249, %p250
      %p252 = scmp.ne.s32.totalorder %s244, %s246
      %p253 = scmp.eq.s32.totalorder %s26, 1
      %p254 = por %p252, %p253
      %p255 = scmp.ne.s32.totalorder %s246, %s247
      %p256 = scmp.eq.s32.totalorder %s26, 0
      %p257 = por %p255, %p256
      %p258 = scmp.ne.s32.totalorder %s246, %s247
      %p259 = scmp.eq.s32.totalorder %s27, 1
      %p260 = por %p258, %p259
      %p262 = scmp.ne.s32.totalorder %s247, %s261
      %p263 = scmp.eq.s32.totalorder %s27, 0
      %p264 = por %p262, %p263
      %s266 = sadd.s32 %s265, 1
      %p269 = scmp.eq.s32.totalorder %s21, 1
      %p270 = scmp.ne.s32.totalorder %s265, %s267
      %p271 = scmp.eq.s32.totalorder %s21, 0
      %p272 = por %p270, %p271
      %p273 = scmp.ne.s32.totalorder %s265, %s267
      %p274 = scmp.eq.s32.totalorder %s26, 1
      %p275 = por %p273, %p274
      %p276 = scmp.ne.s32.totalorder %s267, %s268
      %p277 = scmp.eq.s32.totalorder %s26, 0
      %p278 = por %p276, %p277
      %p279 = scmp.ne.s32.totalorder %s267, %s268
      %p280 = scmp.eq.s32.totalorder %s27, 1
      %p281 = por %p279, %p280
      %p283 = scmp.ne.s32.totalorder %s268, %s282
      %p284 = scmp.eq.s32.totalorder %s27, 0
      %p285 = por %p283, %p284
      %s286 = ssub.s32 %s21, %s28
      %p287 = scmp.eq.s32.totalorder %s286, 0
      %s289 = sadd.s32 %s288, 1
      %s290 = scalar_select %p287, %s288, %s289
      %p293 = pneg %p287
      %p294 = scmp.eq.s32.totalorder %s21, 1
      %p295 = por %p293, %p294
      %p296 = scmp.ne.s32.totalorder %s288, %s291
      %p297 = scmp.eq.s32.totalorder %s21, 0
      %p298 = por %p296, %p297
      %p299 = scmp.ne.s32.totalorder %s288, %s291
      %p300 = scmp.eq.s32.totalorder %s26, 1
      %p301 = por %p299, %p300
      %p302 = scmp.ne.s32.totalorder %s291, %s292
      %p303 = scmp.eq.s32.totalorder %s26, 0
      %p304 = por %p302, %p303
      %p305 = scmp.ne.s32.totalorder %s291, %s292
      %p306 = scmp.eq.s32.totalorder %s27, 1
      %p307 = por %p305, %p306
      %p309 = scmp.ne.s32.totalorder %s292, %s308
      %p310 = scmp.eq.s32.totalorder %s27, 0
      %p311 = por %p309, %p310
      %p312 = scmp.le.s32.totalorder 1, %s21
      %p313 = scmp.lt.s32.totalorder %s21, 3
      %p314 = pnand %p312, %p313
      %p315 = pneg %p314
      // Predicated region
      $region9: #{tpu_custom_call.1} parent=5 // pred_check
        _
      $region10: #{tpu_custom_call.1} parent=5 // pred_check_branch
        %317 = sbr.rel (%p314) target = $region12
      $region11: #{tpu_custom_call.1} parent=5 // pred_region
        %s318 = ssub.s32 %s21, 1
        // Predicated region
        $region13: #{tpu_custom_call.1} parent=11 // pred_check
          %p319 = pneg %p68
        $region14: #{tpu_custom_call.1} parent=11 // pred_check_branch
          %321 = sbr.rel (%p319) target = $region16
        $region15: #{tpu_custom_call.1} parent=11 // pred_region
          _
        $region16: #{tpu_custom_call.1} parent=11 // pred_fallthru
          _
        // Predicated region
        $region17: #{tpu_custom_call.1} parent=11 // pred_check
          %p322 = pneg %p89
        $region18: #{tpu_custom_call.1} parent=11 // pred_check_branch
          %324 = sbr.rel (%p322) target = $region20
        $region19: #{tpu_custom_call.1} parent=11 // pred_region
          _
        $region20: #{tpu_custom_call.1} parent=11 // pred_fallthru
          _
        // Predicated region
        $region21: #{tpu_custom_call.1} parent=11 // pred_check
          %p325 = pneg %p110
        $region22: #{tpu_custom_call.1} parent=11 // pred_check_branch
          %327 = sbr.rel (%p325) target = $region24
        $region23: #{tpu_custom_call.1} parent=11 // pred_region
          _
        $region24: #{tpu_custom_call.1} parent=11 // pred_fallthru
          _
        // Predicated region
        $region25: #{tpu_custom_call.1} parent=11 // pred_check
          %p328 = pneg %p131
        $region26: #{tpu_custom_call.1} parent=11 // pred_check_branch
          %330 = sbr.rel (%p328) target = $region28
        $region27: #{tpu_custom_call.1} parent=11 // pred_region
          _
        $region28: #{tpu_custom_call.1} parent=11 // pred_fallthru
          _
        // Predicated region
        $region29: #{tpu_custom_call.1} parent=11 // pred_check
          %p331 = pneg %p152
        $region30: #{tpu_custom_call.1} parent=11 // pred_check_branch
          %333 = sbr.rel (%p331) target = $region32
        $region31: #{tpu_custom_call.1} parent=11 // pred_region
          _
        $region32: #{tpu_custom_call.1} parent=11 // pred_fallthru
          _
        // Predicated region
        $region33: #{tpu_custom_call.1} parent=11 // pred_check
          %p334 = pneg %p173
        $region34: #{tpu_custom_call.1} parent=11 // pred_check_branch
          %336 = sbr.rel (%p334) target = $region36
        $region35: #{tpu_custom_call.1} parent=11 // pred_region
          _
        $region36: #{tpu_custom_call.1} parent=11 // pred_fallthru
          _
        // Predicated region
        $region37: #{tpu_custom_call.1} parent=11 // pred_check
          %p337 = pneg %p194
        $region38: #{tpu_custom_call.1} parent=11 // pred_check_branch
          %339 = sbr.rel (%p337) target = $region40
        $region39: #{tpu_custom_call.1} parent=11 // pred_region
          _
        $region40: #{tpu_custom_call.1} parent=11 // pred_fallthru
          _
        // Predicated region
        $region41: #{tpu_custom_call.1} parent=11 // pred_check
          %p340 = pneg %p215
        $region42: #{tpu_custom_call.1} parent=11 // pred_check_branch
          %342 = sbr.rel (%p340) target = $region44
        $region43: #{tpu_custom_call.1} parent=11 // pred_region
          _
        $region44: #{tpu_custom_call.1} parent=11 // pred_fallthru
          _
        // Predicated region
        $region45: #{tpu_custom_call.1} parent=11 // pred_check
          %p343 = pneg %p236
        $region46: #{tpu_custom_call.1} parent=11 // pred_check_branch
          %345 = sbr.rel (%p343) target = $region48
        $region47: #{tpu_custom_call.1} parent=11 // pred_region
          _
        $region48: #{tpu_custom_call.1} parent=11 // pred_fallthru
          _
        // Predicated region
        $region49: #{tpu_custom_call.1} parent=11 // pred_check
          %p346 = pneg %p257
        $region50: #{tpu_custom_call.1} parent=11 // pred_check_branch
          %348 = sbr.rel (%p346) target = $region52
        $region51: #{tpu_custom_call.1} parent=11 // pred_region
          _
        $region52: #{tpu_custom_call.1} parent=11 // pred_fallthru
          _
        // Predicated region
        $region53: #{tpu_custom_call.1} parent=11 // pred_check
          %p349 = pneg %p278
        $region54: #{tpu_custom_call.1} parent=11 // pred_check_branch
          %351 = sbr.rel (%p349) target = $region56
        $region55: #{tpu_custom_call.1} parent=11 // pred_region
          _
        $region56: #{tpu_custom_call.1} parent=11 // pred_fallthru
          _
      $region12: #{tpu_custom_call.1} parent=5 // pred_fallthru
        _
      %p352 = scmp.lt.s32.totalorder %s21, 2
      // Predicated region
      $region57: #{tpu_custom_call.1} parent=5 // pred_check
        %p353 = pneg %p352
      $region58: #{tpu_custom_call.1} parent=5 // pred_check_branch
        %355 = sbr.rel (%p353) target = $region60
      $region59: #{tpu_custom_call.1} parent=5 // pred_region
        // Predicated region
        $region61: #{tpu_custom_call.1} parent=59 // pred_check
          %p356 = pneg %p41
        $region62: #{tpu_custom_call.1} parent=59 // pred_check_branch
          %358 = sbr.rel (%p356) target = $region64
        $region63: #{tpu_custom_call.1} parent=59 // pred_region
          %p359 = scmp.lt.s32.totalorder %s21, 1
          %s360 = scalar_select %p359, %s21, 1
          %s361 = smul.addr %s360, 4
          %s362 = smul.addr %s361, 8
          %s363 = scalar_lea.vmem %s0, %s362
        $region64: #{tpu_custom_call.1} parent=59 // pred_fallthru
          _
      $region60: #{tpu_custom_call.1} parent=5 // pred_fallthru
        _
      %p364 = scmp.le.s32.totalorder 1, %s21
      %p365 = scmp.lt.s32.totalorder %s21, 3
      %p366 = pnand %p364, %p365
      %p367 = pneg %p366
      // Predicated region
      $region65: #{tpu_custom_call.1} parent=5 // pred_check
        _
      $region66: #{tpu_custom_call.1} parent=5 // pred_check_branch
        %369 = sbr.rel (%p366) target = $region68
      $region67: #{tpu_custom_call.1} parent=5 // pred_region
        %s370 = ssub.s32 %s21, 1
        %p371 = scmp.lt.s32.totalorder %s26, 1
        %s372 = scalar_select %p371, %s26, 1
        %s373 = smul.addr %s372, 4
        %s374 = smul.addr %s373, 8
        %s375 = scalar_lea.vmem %s0, %s374
        %p376 = pneg %p47
        %p377 = pneg %p44
        %p378 = pneg %p68
        %p379 = pneg %p65
        %p380 = pneg %p89
        %p381 = pneg %p86
        %p382 = pneg %p110
        %p383 = pneg %p107
        %p384 = pneg %p131
        %p385 = pneg %p128
        %p386 = pneg %p152
        %p387 = pneg %p149
        %p388 = pneg %p173
        %p389 = pneg %p170
        %p390 = pneg %p194
        %p391 = pneg %p191
        %p392 = pneg %p215
        %p393 = pneg %p212
        %p394 = pneg %p236
        %p395 = pneg %p233
        %p396 = pneg %p257
        %p397 = pneg %p254
        %p398 = pneg %p278
        %p399 = pneg %p275
        %p400 = pneg %p304
        %p401 = pneg %p301
        %s402 = sand.u32 %s291, 1
        %s403 = scalar_lea.sflag [#allocation4], %s402
        %s404 = sand.u32 %s291, 1
        %s405 = smul.addr %s404, 32
        %s406 = scalar_lea.vmem [#allocation3], %s405
        %p407 = scmp.lt.s32.totalorder %s26, 1
        %s408 = scalar_select %p407, %s26, 1
        %s409 = smul.addr %s408, 4
        %s410 = smul.addr %s409, 8
        %s411 = scalar_lea.vmem %s0, %s410
        %v412 = vld [vmem:[%s411] sm:$0xff]
        %v413 = vld [vmem:[%s411 + $0x8] sm:$0xff]
        %v414 = vld [vmem:[%s411 + $0x10] sm:$0xff]
        %v415 = vld [vmem:[%s411 + $0x18] sm:$0xff]
        %v416 = vld [vmem:[%s1] sm:$0xff]
        %v417 = vld [vmem:[%s1 + $0x8] sm:$0xff]
        %v418 = vld [vmem:[%s1 + $0x10] sm:$0xff]
        %v419 = vld [vmem:[%s1 + $0x18] sm:$0xff]
        %v420 = vld [vmem:[%s2] sm:$0xff]
        %v421 = vld [vmem:[%s2 + $0x8] sm:$0xff]
        %v422 = vld [vmem:[%s2 + $0x10] sm:$0xff]
        %v423 = vld [vmem:[%s2 + $0x18] sm:$0xff]
        %425 = vset.pattern.permute.xlu0 0
        %426 = vperm.xlu0 %425, %v420
        %v427 = vpop.permute.xlu0 %426
        %430 = vset.pattern.permute.xlu0 0
        %431 = vperm.xlu0 %430, %v421
        %v432 = vpop.permute.xlu0 %431
        %435 = vset.pattern.permute.xlu0 0
        %436 = vperm.xlu0 %435, %v422
        %v437 = vpop.permute.xlu0 %436
        %440 = vset.pattern.permute.xlu0 0
        %441 = vperm.xlu0 %440, %v423
        %v442 = vpop.permute.xlu0 %441
        %vm444 = vcmask 130048
        %v446 = vsel %vm444, %v416, 0
        %v449 = vsel %vm444, %v417, 0
        %v452 = vsel %vm444, %v418, 0
        %v455 = vsel %vm444, %v419, 0
        %457 = vmatprep.subr.mxu0 %v413
        %458 = vmatpush1.msra.mxu0 %v412
        %459 = vmatprep.subr.mxu0 %v415
        %460 = vmatpush1.msra.mxu0 %v414
        %461 = vmatprep.subr.mxu0 0.0
        %462 = vmatpush1.msra.mxu0 0.0
        %463 = vmatprep.subr.mxu0 0.0
        %464 = vmatpush1.msra.mxu0 0.0
        %465 = vmatprep.subr.mxu0 0.0
        %466 = vmatpush1.msra.mxu0 0.0
        %467 = vmatprep.subr.mxu0 0.0
        %468 = vmatpush1.msra.mxu0 0.0
        %469 = vmatprep.subr.mxu0 0.0
        %470 = vmatpush1.msra.mxu0 0.0
        %471 = vmatprep.subr.mxu0 0.0
        %472 = vmatpush1.msra.mxu0 0.0
        %473 = vmatprep.subr.mxu0 0.0
        %474 = vmatpush1.msra.mxu0 0.0
        %475 = vmatprep.subr.mxu0 0.0
        %476 = vmatpush1.msra.mxu0 0.0
        %477 = vmatprep.subr.mxu0 0.0
        %478 = vmatpush1.msra.mxu0 0.0
        %479 = vmatprep.subr.mxu0 0.0
        %480 = vmatpush1.msra.mxu0 0.0
        %481 = vmatprep.subr.mxu0 0.0
        %482 = vmatpush1.msra.mxu0 0.0
        %483 = vmatprep.subr.mxu0 0.0
        %484 = vmatpush1.msra.mxu0 0.0
        %485 = vmatprep.subr.mxu0 0.0
        %486 = vmatpush1.msra.mxu0 0.0
        %487 = vmatprep.subr.mxu0 0.0
        %488 = vmatpush1.msra.mxu0 0.0
        %489 = vmatprep.subr.mxu0 0.0
        %490 = vmatpush1.msra.mxu0 0.0
        %491 = vmatprep.subr.mxu0 0.0
        %492 = vmatpush1.msra.mxu0 0.0
        %493 = vmatprep.subr.mxu0 0.0
        %494 = vmatpush1.msra.mxu0 0.0
        %495 = vmatprep.subr.mxu0 0.0
        %496 = vmatpush1.msra.mxu0 0.0
        %497 = vmatprep.subr.mxu0 0.0
        %498 = vmatpush1.msra.mxu0 0.0
        %499 = vmatprep.subr.mxu0 0.0
        %500 = vmatpush1.msra.mxu0 0.0
        %501 = vmatprep.subr.mxu0 0.0
        %502 = vmatpush1.msra.mxu0 0.0
        %503 = vmatprep.subr.mxu0 0.0
        %504 = vmatpush1.msra.mxu0 0.0
        %505 = vmatprep.subr.mxu0 0.0
        %506 = vmatpush1.msra.mxu0 0.0
        %507 = vmatprep.subr.mxu0 0.0
        %508 = vmatpush1.msra.mxu0 0.0
        %509 = vmatprep.subr.mxu0 0.0
        %510 = vmatpush1.msra.mxu0 0.0
        %511 = vmatprep.subr.mxu0 0.0
        %512 = vmatpush1.msra.mxu0 0.0
        %513 = vmatprep.subr.mxu0 0.0
        %514 = vmatpush1.msra.mxu0 0.0
        %515 = vmatprep.subr.mxu0 0.0
        %516 = vmatpush1.msra.mxu0 0.0
        %517 = vmatprep.subr.mxu0 0.0
        %518 = vmatpush1.msra.mxu0 0.0
        %519 = vmatprep.subr.mxu0 0.0
        %520 = vmatpush1.msra.mxu0 0.0
        %521 = vmatprep.mubr.f32.mxu0 0.0
        %522 = vmatmul.mubr.f32.gmra.mrb[0].mxu0 %v446
        %v523 = vpop.f32.mrb[0].mxu0
        %v524 = vadd.f32 %v427, %v523
        %v525 = vpop.f32.mrb[0].mxu0
        %v526 = vadd.f32 %v427, %v525
        %527 = vmatprep.mubr.f32.mxu0 0.0
        %528 = vmatmul.mubr.f32.gmra.mrb[0].mxu0 %v449
        %v529 = vpop.f32.mrb[0].mxu0
        %v530 = vadd.f32 %v432, %v529
        %v531 = vpop.f32.mrb[0].mxu0
        %v532 = vadd.f32 %v432, %v531
        %533 = vmatprep.mubr.f32.mxu0 0.0
        %534 = vmatmul.mubr.f32.gmra.mrb[0].mxu0 %v452
        %v535 = vpop.f32.mrb[0].mxu0
        %v536 = vadd.f32 %v437, %v535
        %v537 = vpop.f32.mrb[0].mxu0
        %v538 = vadd.f32 %v437, %v537
        %539 = vmatprep.mubr.f32.mxu0 0.0
        %540 = vmatmul.mubr.f32.gmra.mrb[0].mxu0 %v455
        %v541 = vpop.f32.mrb[0].mxu0
        %v542 = vadd.f32 %v442, %v541
        %v543 = vpop.f32.mrb[0].mxu0
        %v544 = vadd.f32 %v442, %v543
        %545 = vdwg.mxu0
        %v546 = vadd.f32 %v524, 3.0
        %v547 = vadd.f32 %v526, 3.0
        %v548 = vadd.f32 %v530, 3.0
        %v549 = vadd.f32 %v532, 3.0
        %v550 = vadd.f32 %v536, 3.0
        %v551 = vadd.f32 %v538, 3.0
        %v552 = vadd.f32 %v542, 3.0
        %v553 = vadd.f32 %v544, 3.0
        %v554 = vmax.f32 %v546, 0.0
        %v555 = vmax.f32 %v547, 0.0
        %v556 = vmax.f32 %v548, 0.0
        %v557 = vmax.f32 %v549, 0.0
        %v558 = vmax.f32 %v550, 0.0
        %v559 = vmax.f32 %v551, 0.0
        %v560 = vmax.f32 %v552, 0.0
        %v561 = vmax.f32 %v553, 0.0
        %v562 = vmin.f32 %v554, 6.0
        %v563 = vmin.f32 %v555, 6.0
        %v564 = vmin.f32 %v556, 6.0
        %v565 = vmin.f32 %v557, 6.0
        %v566 = vmin.f32 %v558, 6.0
        %v567 = vmin.f32 %v559, 6.0
        %v568 = vmin.f32 %v560, 6.0
        %v569 = vmin.f32 %v561, 6.0
        %v570 = vmul.f32 %v524, %v562
        %v571 = vmul.f32 %v526, %v563
        %v572 = vmul.f32 %v530, %v564
        %v573 = vmul.f32 %v532, %v565
        %v574 = vmul.f32 %v536, %v566
        %v575 = vmul.f32 %v538, %v567
        %v576 = vmul.f32 %v542, %v568
        %v577 = vmul.f32 %v544, %v569
        %v578 = vmul.f32 %v570, 0.16666667
        %v579 = vmul.f32 %v571, 0.16666667
        %v580 = vmul.f32 %v572, 0.16666667
        %v581 = vmul.f32 %v573, 0.16666667
        %v582 = vmul.f32 %v574, 0.16666667
        %v583 = vmul.f32 %v575, 0.16666667
        %v584 = vmul.f32 %v576, 0.16666667
        %v585 = vmul.f32 %v577, 0.16666667
        %586 = vst [vmem:[#allocation2] sm:$0xff] 0.0
        %587 = vst [vmem:[#allocation2 + $0x20] sm:$0xff] 0.0
        %588 = vst [vmem:[#allocation2 + $0x40] sm:$0xff] 0.0
        %589 = vst [vmem:[#allocation2 + $0x60] sm:$0xff] 0.0
        %590 = vst [vmem:[#allocation2 + $0x18] sm:$0xff] 0.0
        %591 = vst [vmem:[#allocation2 + $0x38] sm:$0xff] 0.0
        %592 = vst [vmem:[#allocation2 + $0x58] sm:$0xff] 0.0
        %593 = vst [vmem:[#allocation2 + $0x78] sm:$0xff] 0.0
        %594 = vst [vmem:[#allocation2 + $0x8] sm:$0xff] %v578
        %595 = vst [vmem:[#allocation2 + $0x10] sm:$0xff] %v579
        %596 = vst [vmem:[#allocation2 + $0x28] sm:$0xff] %v580
        %597 = vst [vmem:[#allocation2 + $0x30] sm:$0xff] %v581
        %598 = vst [vmem:[#allocation2 + $0x48] sm:$0xff] %v582
        %599 = vst [vmem:[#allocation2 + $0x50] sm:$0xff] %v583
        %600 = vst [vmem:[#allocation2 + $0x68] sm:$0xff] %v584
        %601 = vst [vmem:[#allocation2 + $0x70] sm:$0xff] %v585
        %v602 = vld [vmem:[%s3] sm:$0xff]
        %v603 = vld [vmem:[%s3 + $0x8] sm:$0xff]
        %v604 = vld [vmem:[%s3 + $0x10] sm:$0xff]
        %v605 = vld [vmem:[%s3 + $0x18] sm:$0xff]
        %v606 = vld [vmem:[%s5] sm:$0xff]
        %v607 = vld [vmem:[%s5 + $0x8] sm:$0xff]
        %v608 = vld [vmem:[%s5 + $0x10] sm:$0x1]
        %v609 = vld [vmem:[%s5 + $0x18] sm:$0x1]
        %v610 = vld [vmem:[#allocation2] sm:$0xff]
        %v611 = vld [vmem:[#allocation2 + $0x8] sm:$0xff]
        %v612 = vld [vmem:[#allocation2 + $0x10] sm:$0xff]
        %v613 = vld [vmem:[#allocation2 + $0x20] sm:$0xff]
        %v614 = vld [vmem:[#allocation2 + $0x28] sm:$0xff]
        %v615 = vld [vmem:[#allocation2 + $0x30] sm:$0xff]
        %v616 = vld [vmem:[#allocation2 + $0x40] sm:$0xff]
        %v617 = vld [vmem:[#allocation2 + $0x48] sm:$0xff]
        %v618 = vld [vmem:[#allocation2 + $0x50] sm:$0xff]
        %v619 = vld [vmem:[#allocation2 + $0x60] sm:$0xff]
        %v620 = vld [vmem:[#allocation2 + $0x68] sm:$0xff]
        %v621 = vld [vmem:[#allocation2 + $0x70] sm:$0xff]
        %623 = vset.pattern.permute.xlu0 0
        %624 = vperm.xlu0 %623, %v602
        %v625 = vpop.permute.xlu0 %624
        %628 = vset.pattern.permute.xlu0 0
        %629 = vperm.xlu0 %628, %v603
        %v630 = vpop.permute.xlu0 %629
        %633 = vset.pattern.permute.xlu0 0
        %634 = vperm.xlu0 %633, %v604
        %v635 = vpop.permute.xlu0 %634
        %638 = vset.pattern.permute.xlu0 0
        %639 = vperm.xlu0 %638, %v605
        %v640 = vpop.permute.xlu0 %639
        %v642 = vmul.f32 %v610, %v625
        %v643 = vmul.f32 %v611, %v625
        %v644 = vmul.f32 %v612, %v625
        %v645 = vmul.f32 %v613, %v630
        %v646 = vmul.f32 %v614, %v630
        %v647 = vmul.f32 %v615, %v630
        %v648 = vmul.f32 %v616, %v635
        %v649 = vmul.f32 %v617, %v635
        %v650 = vmul.f32 %v618, %v635
        %v651 = vmul.f32 %v619, %v640
        %v652 = vmul.f32 %v620, %v640
        %v653 = vmul.f32 %v621, %v640
        %v654 = vlaneseq
        %v655 = vshrl.u32 %v654, 7
        %v656 = vsub.s32 0, %v655
        %v657 = vrot.slane %v606, %v656
        %v658 = vlaneseq
        %v659 = vshrl.u32 %v658, 7
        %v660 = vsub.s32 0, %v659
        %v661 = vrot.slane %v607, %v660
        %664 = vrot.lane.b32.xlu0 %v657, 111
        %v665 = vpop.permute.xlu0 %664
        %666 = vrot.lane.b32.xlu0 %v661, 111
        %v667 = vpop.permute.xlu0 %666
        %vm668 = vcmask 908288
        %v669 = vsel %vm668, %v665, %v667
        %v673 = vmul.f32 %v642, %v665
        %v674 = vmul.f32 %v643, %v669
        %v675 = vmul.f32 %v644, %v667
        %v676 = vmul.f32 %v645, %v665
        %v677 = vmul.f32 %v646, %v669
        %v678 = vmul.f32 %v647, %v667
        %v679 = vmul.f32 %v648, %v665
        %v680 = vmul.f32 %v649, %v669
        %v681 = vmul.f32 %v650, %v667
        %v682 = vmul.f32 %v651, %v665
        %v683 = vmul.f32 %v652, %v669
        %v684 = vmul.f32 %v653, %v667
        %v685 = vadd.f32 %v673, 0.0
        %v686 = vadd.f32 %v674, 0.0
        %v687 = vadd.f32 %v675, 0.0
        %v688 = vadd.f32 %v676, 0.0
        %v689 = vadd.f32 %v677, 0.0
        %v690 = vadd.f32 %v678, 0.0
        %v691 = vadd.f32 %v679, 0.0
        %v692 = vadd.f32 %v680, 0.0
        %v693 = vadd.f32 %v681, 0.0
        %v694 = vadd.f32 %v682, 0.0
        %v695 = vadd.f32 %v683, 0.0
        %v696 = vadd.f32 %v684, 0.0
        %697 = vset.pattern.permute.xlu0 1
        %698 = vperm.xlu0 %697, %v602
        %v699 = vpop.permute.xlu0 %698
        %701 = vset.pattern.permute.xlu0 1
        %702 = vperm.xlu0 %701, %v603
        %v703 = vpop.permute.xlu0 %702
        %705 = vset.pattern.permute.xlu0 1
        %706 = vperm.xlu0 %705, %v604
        %v707 = vpop.permute.xlu0 %706
        %709 = vset.pattern.permute.xlu0 1
        %710 = vperm.xlu0 %709, %v605
        %v711 = vpop.permute.xlu0 %710
        %v713 = vmul.f32 %v610, %v699
        %v714 = vmul.f32 %v611, %v699
        %v715 = vmul.f32 %v612, %v699
        %v716 = vmul.f32 %v613, %v703
        %v717 = vmul.f32 %v614, %v703
        %v718 = vmul.f32 %v615, %v703
        %v719 = vmul.f32 %v616, %v707
        %v720 = vmul.f32 %v617, %v707
        %v721 = vmul.f32 %v618, %v707
        %v722 = vmul.f32 %v619, %v711
        %v723 = vmul.f32 %v620, %v711
        %v724 = vmul.f32 %v621, %v711
        %v725 = vlaneseq
        %v726 = vshrl.u32 %v725, 7
        %v727 = vsub.s32 1, %v726
        %v728 = vrot.slane %v606, %v727
        %v729 = vlaneseq
        %v730 = vshrl.u32 %v729, 7
        %v731 = vsub.s32 1, %v730
        %v732 = vrot.slane %v607, %v731
        %735 = vrot.lane.b32.xlu0 %v728, 112
        %v736 = vpop.permute.xlu0 %735
        %737 = vrot.lane.b32.xlu0 %v732, 112
        %v738 = vpop.permute.xlu0 %737
        %vm739 = vcmask 916480
        %v740 = vsel %vm739, %v736, %v738
        %v744 = vmul.f32 %v713, %v736
        %v745 = vmul.f32 %v714, %v740
        %v746 = vmul.f32 %v715, %v738
        %v747 = vmul.f32 %v716, %v736
        %v748 = vmul.f32 %v717, %v740
        %v749 = vmul.f32 %v718, %v738
        %v750 = vmul.f32 %v719, %v736
        %v751 = vmul.f32 %v720, %v740
        %v752 = vmul.f32 %v721, %v738
        %v753 = vmul.f32 %v722, %v736
        %v754 = vmul.f32 %v723, %v740
        %v755 = vmul.f32 %v724, %v738
        %768 = vrot.lane.b32.xlu0 %v744, 127
        %v769 = vpop.permute.xlu0 %768
        %770 = vrot.lane.b32.xlu0 %v745, 127
        %v771 = vpop.permute.xlu0 %770
        %772 = vrot.lane.b32.xlu0 %v746, 127
        %v773 = vpop.permute.xlu0 %772
        %774 = vrot.lane.b32.xlu0 %v747, 127
        %v775 = vpop.permute.xlu0 %774
        %776 = vrot.lane.b32.xlu0 %v748, 127
        %v777 = vpop.permute.xlu0 %776
        %778 = vrot.lane.b32.xlu0 %v749, 127
        %v779 = vpop.permute.xlu0 %778
        %780 = vrot.lane.b32.xlu0 %v750, 127
        %v781 = vpop.permute.xlu0 %780
        %782 = vrot.lane.b32.xlu0 %v751, 127
        %v783 = vpop.permute.xlu0 %782
        %784 = vrot.lane.b32.xlu0 %v752, 127
        %v785 = vpop.permute.xlu0 %784
        %786 = vrot.lane.b32.xlu0 %v753, 127
        %v787 = vpop.permute.xlu0 %786
        %788 = vrot.lane.b32.xlu0 %v754, 127
        %v789 = vpop.permute.xlu0 %788
        %790 = vrot.lane.b32.xlu0 %v755, 127
        %v791 = vpop.permute.xlu0 %790
        %vm792 = vcmask 1039360
        %v793 = vsel %vm792, %v769, %v771
        %v794 = vsel %vm792, %v771, %v773
        %v795 = vsel %vm792, %v775, %v777
        %v796 = vsel %vm792, %v777, %v779
        %v797 = vsel %vm792, %v781, %v783
        %v798 = vsel %vm792, %v783, %v785
        %v799 = vsel %vm792, %v787, %v789
        %v800 = vsel %vm792, %v789, %v791
        %v813 = vadd.f32 %v685, %v793
        %v814 = vadd.f32 %v686, %v794
        %v815 = vadd.f32 %v687, %v773
        %v816 = vadd.f32 %v688, %v795
        %v817 = vadd.f32 %v689, %v796
        %v818 = vadd.f32 %v690, %v779
        %v819 = vadd.f32 %v691, %v797
        %v820 = vadd.f32 %v692, %v798
        %v821 = vadd.f32 %v693, %v785
        %v822 = vadd.f32 %v694, %v799
        %v823 = vadd.f32 %v695, %v800
        %v824 = vadd.f32 %v696, %v791
        %825 = vset.pattern.permute.xlu0 2
        %826 = vperm.xlu0 %825, %v602
        %v827 = vpop.permute.xlu0 %826
        %829 = vset.pattern.permute.xlu0 2
        %830 = vperm.xlu0 %829, %v603
        %v831 = vpop.permute.xlu0 %830
        %833 = vset.pattern.permute.xlu0 2
        %834 = vperm.xlu0 %833, %v604
        %v835 = vpop.permute.xlu0 %834
        %837 = vset.pattern.permute.xlu0 2
        %838 = vperm.xlu0 %837, %v605
        %v839 = vpop.permute.xlu0 %838
        %v841 = vmul.f32 %v610, %v827
        %v842 = vmul.f32 %v611, %v827
        %v843 = vmul.f32 %v612, %v827
        %v844 = vmul.f32 %v613, %v831
        %v845 = vmul.f32 %v614, %v831
        %v846 = vmul.f32 %v615, %v831
        %v847 = vmul.f32 %v616, %v835
        %v848 = vmul.f32 %v617, %v835
        %v849 = vmul.f32 %v618, %v835
        %v850 = vmul.f32 %v619, %v839
        %v851 = vmul.f32 %v620, %v839
        %v852 = vmul.f32 %v621, %v839
        %v853 = vlaneseq
        %v854 = vshrl.u32 %v853, 7
        %v855 = vsub.s32 2, %v854
        %v856 = vrot.slane %v606, %v855
        %v857 = vlaneseq
        %v858 = vshrl.u32 %v857, 7
        %v859 = vsub.s32 2, %v858
        %v860 = vrot.slane %v607, %v859
        %863 = vrot.lane.b32.xlu0 %v856, 113
        %v864 = vpop.permute.xlu0 %863
        %865 = vrot.lane.b32.xlu0 %v860, 113
        %v866 = vpop.permute.xlu0 %865
        %vm867 = vcmask 924672
        %v868 = vsel %vm867, %v864, %v866
        %v872 = vmul.f32 %v841, %v864
        %v873 = vmul.f32 %v842, %v868
        %v874 = vmul.f32 %v843, %v866
        %v875 = vmul.f32 %v844, %v864
        %v876 = vmul.f32 %v845, %v868
        %v877 = vmul.f32 %v846, %v866
        %v878 = vmul.f32 %v847, %v864
        %v879 = vmul.f32 %v848, %v868
        %v880 = vmul.f32 %v849, %v866
        %v881 = vmul.f32 %v850, %v864
        %v882 = vmul.f32 %v851, %v868
        %v883 = vmul.f32 %v852, %v866
        %896 = vrot.lane.b32.xlu0 %v872, 126
        %v897 = vpop.permute.xlu0 %896
        %898 = vrot.lane.b32.xlu0 %v873, 126
        %v899 = vpop.permute.xlu0 %898
        %900 = vrot.lane.b32.xlu0 %v874, 126
        %v901 = vpop.permute.xlu0 %900
        %902 = vrot.lane.b32.xlu0 %v875, 126
        %v903 = vpop.permute.xlu0 %902
        %904 = vrot.lane.b32.xlu0 %v876, 126
        %v905 = vpop.permute.xlu0 %904
        %906 = vrot.lane.b32.xlu0 %v877, 126
        %v907 = vpop.permute.xlu0 %906
        %908 = vrot.lane.b32.xlu0 %v878, 126
        %v909 = vpop.permute.xlu0 %908
        %910 = vrot.lane.b32.xlu0 %v879, 126
        %v911 = vpop.permute.xlu0 %910
        %912 = vrot.lane.b32.xlu0 %v880, 126
        %v913 = vpop.permute.xlu0 %912
        %914 = vrot.lane.b32.xlu0 %v881, 126
        %v915 = vpop.permute.xlu0 %914
        %916 = vrot.lane.b32.xlu0 %v882, 126
        %v917 = vpop.permute.xlu0 %916
        %918 = vrot.lane.b32.xlu0 %v883, 126
        %v919 = vpop.permute.xlu0 %918
        %vm920 = vcmask 1031168
        %v921 = vsel %vm920, %v897, %v899
        %v922 = vsel %vm920, %v899, %v901
        %v923 = vsel %vm920, %v903, %v905
        %v924 = vsel %vm920, %v905, %v907
        %v925 = vsel %vm920, %v909, %v911
        %v926 = vsel %vm920, %v911, %v913
        %v927 = vsel %vm920, %v915, %v917
        %v928 = vsel %vm920, %v917, %v919
        %v941 = vadd.f32 %v813, %v921
        %v942 = vadd.f32 %v814, %v922
        %v943 = vadd.f32 %v815, %v901
        %v944 = vadd.f32 %v816, %v923
        %v945 = vadd.f32 %v817, %v924
        %v946 = vadd.f32 %v818, %v907
        %v947 = vadd.f32 %v819, %v925
        %v948 = vadd.f32 %v820, %v926
        %v949 = vadd.f32 %v821, %v913
        %v950 = vadd.f32 %v822, %v927
        %v951 = vadd.f32 %v823, %v928
        %v952 = vadd.f32 %v824, %v919
        %953 = vset.pattern.permute.xlu0 3
        %954 = vperm.xlu0 %953, %v602
        %v955 = vpop.permute.xlu0 %954
        %957 = vset.pattern.permute.xlu0 3
        %958 = vperm.xlu0 %957, %v603
        %v959 = vpop.permute.xlu0 %958
        %961 = vset.pattern.permute.xlu0 3
        %962 = vperm.xlu0 %961, %v604
        %v963 = vpop.permute.xlu0 %962
        %965 = vset.pattern.permute.xlu0 3
        %966 = vperm.xlu0 %965, %v605
        %v967 = vpop.permute.xlu0 %966
        %v969 = vmul.f32 %v610, %v955
        %v970 = vmul.f32 %v611, %v955
        %v971 = vmul.f32 %v612, %v955
        %v972 = vmul.f32 %v613, %v959
        %v973 = vmul.f32 %v614, %v959
        %v974 = vmul.f32 %v615, %v959
        %v975 = vmul.f32 %v616, %v963
        %v976 = vmul.f32 %v617, %v963
        %v977 = vmul.f32 %v618, %v963
        %v978 = vmul.f32 %v619, %v967
        %v979 = vmul.f32 %v620, %v967
        %v980 = vmul.f32 %v621, %v967
        %v981 = vlaneseq
        %v982 = vshrl.u32 %v981, 7
        %v983 = vsub.s32 3, %v982
        %v984 = vrot.slane %v606, %v983
        %v985 = vlaneseq
        %v986 = vshrl.u32 %v985, 7
        %v987 = vsub.s32 3, %v986
        %v988 = vrot.slane %v607, %v987
        %991 = vrot.lane.b32.xlu0 %v984, 127
        %v992 = vpop.permute.xlu0 %991
        %993 = vrot.lane.b32.xlu0 %v988, 127
        %v994 = vpop.permute.xlu0 %993
        %v995 = vsel %vm792, %v992, %v994
        %v999 = vmul.f32 %v969, %v992
        %v1000 = vmul.f32 %v970, %v995
        %v1001 = vmul.f32 %v971, %v994
        %v1002 = vmul.f32 %v972, %v992
        %v1003 = vmul.f32 %v973, %v995
        %v1004 = vmul.f32 %v974, %v994
        %v1005 = vmul.f32 %v975, %v992
        %v1006 = vmul.f32 %v976, %v995
        %v1007 = vmul.f32 %v977, %v994
        %v1008 = vmul.f32 %v978, %v992
        %v1009 = vmul.f32 %v979, %v995
        %v1010 = vmul.f32 %v980, %v994
        %1023 = vrot.lane.b32.xlu0 %v999, 112
        %v1024 = vpop.permute.xlu0 %1023
        %1025 = vrot.lane.b32.xlu0 %v1000, 112
        %v1026 = vpop.permute.xlu0 %1025
        %1027 = vrot.lane.b32.xlu0 %v1001, 112
        %v1028 = vpop.permute.xlu0 %1027
        %1029 = vrot.lane.b32.xlu0 %v1002, 112
        %v1030 = vpop.permute.xlu0 %1029
        %1031 = vrot.lane.b32.xlu0 %v1003, 112
        %v1032 = vpop.permute.xlu0 %1031
        %1033 = vrot.lane.b32.xlu0 %v1004, 112
        %v1034 = vpop.permute.xlu0 %1033
        %1035 = vrot.lane.b32.xlu0 %v1005, 112
        %v1036 = vpop.permute.xlu0 %1035
        %1037 = vrot.lane.b32.xlu0 %v1006, 112
        %v1038 = vpop.permute.xlu0 %1037
        %1039 = vrot.lane.b32.xlu0 %v1007, 112
        %v1040 = vpop.permute.xlu0 %1039
        %1041 = vrot.lane.b32.xlu0 %v1008, 112
        %v1042 = vpop.permute.xlu0 %1041
        %1043 = vrot.lane.b32.xlu0 %v1009, 112
        %v1044 = vpop.permute.xlu0 %1043
        %1045 = vrot.lane.b32.xlu0 %v1010, 112
        %v1046 = vpop.permute.xlu0 %1045
        %v1047 = vsel %vm739, %v1024, %v1026
        %v1048 = vsel %vm739, %v1026, %v1028
        %v1049 = vsel %vm739, %v1030, %v1032
        %v1050 = vsel %vm739, %v1032, %v1034
        %v1051 = vsel %vm739, %v1036, %v1038
        %v1052 = vsel %vm739, %v1038, %v1040
        %v1053 = vsel %vm739, %v1042, %v1044
        %v1054 = vsel %vm739, %v1044, %v1046
        %v1067 = vadd.f32 %v941, %v1047
        %v1068 = vadd.f32 %v942, %v1048
        %v1069 = vadd.f32 %v943, %v1028
        %v1070 = vadd.f32 %v944, %v1049
        %v1071 = vadd.f32 %v945, %v1050
        %v1072 = vadd.f32 %v946, %v1034
        %v1073 = vadd.f32 %v947, %v1051
        %v1074 = vadd.f32 %v948, %v1052
        %v1075 = vadd.f32 %v949, %v1040
        %v1076 = vadd.f32 %v950, %v1053
        %v1077 = vadd.f32 %v951, %v1054
        %v1078 = vadd.f32 %v952, %v1046
        %1079 = vset.pattern.permute.xlu0 4
        %1080 = vperm.xlu0 %1079, %v602
        %v1081 = vpop.permute.xlu0 %1080
        %1083 = vset.pattern.permute.xlu0 4
        %1084 = vperm.xlu0 %1083, %v603
        %v1085 = vpop.permute.xlu0 %1084
        %1087 = vset.pattern.permute.xlu0 4
        %1088 = vperm.xlu0 %1087, %v604
        %v1089 = vpop.permute.xlu0 %1088
        %1091 = vset.pattern.permute.xlu0 4
        %1092 = vperm.xlu0 %1091, %v605
        %v1093 = vpop.permute.xlu0 %1092
        %v1095 = vmul.f32 %v611, %v1081
        %v1096 = vmul.f32 %v612, %v1081
        %v1097 = vmul.f32 %v614, %v1085
        %v1098 = vmul.f32 %v615, %v1085
        %v1099 = vmul.f32 %v617, %v1089
        %v1100 = vmul.f32 %v618, %v1089
        %v1101 = vmul.f32 %v620, %v1093
        %v1102 = vmul.f32 %v621, %v1093
        %v1103 = vlaneseq
        %v1104 = vshrl.u32 %v1103, 7
        %v1105 = vsub.s32 4, %v1104
        %v1106 = vrot.slane %v606, %v1105
        %v1107 = vlaneseq
        %v1108 = vshrl.u32 %v1107, 7
        %v1109 = vsub.s32 4, %v1108
        %v1110 = vrot.slane %v607, %v1109
        %v1111 = vmul.f32 %v1095, %v1106
        %v1112 = vmul.f32 %v1096, %v1110
        %v1113 = vmul.f32 %v1097, %v1106
        %v1114 = vmul.f32 %v1098, %v1110
        %v1115 = vmul.f32 %v1099, %v1106
        %v1116 = vmul.f32 %v1100, %v1110
        %v1117 = vmul.f32 %v1101, %v1106
        %v1118 = vmul.f32 %v1102, %v1110
        %1127 = vrot.lane.b32.xlu0 %v1111, 111
        %v1128 = vpop.permute.xlu0 %1127
        %1129 = vrot.lane.b32.xlu0 %v1112, 111
        %v1130 = vpop.permute.xlu0 %1129
        %1131 = vrot.lane.b32.xlu0 %v1113, 111
        %v1132 = vpop.permute.xlu0 %1131
        %1133 = vrot.lane.b32.xlu0 %v1114, 111
        %v1134 = vpop.permute.xlu0 %1133
        %1135 = vrot.lane.b32.xlu0 %v1115, 111
        %v1136 = vpop.permute.xlu0 %1135
        %1137 = vrot.lane.b32.xlu0 %v1116, 111
        %v1138 = vpop.permute.xlu0 %1137
        %1139 = vrot.lane.b32.xlu0 %v1117, 111
        %v1140 = vpop.permute.xlu0 %1139
        %1141 = vrot.lane.b32.xlu0 %v1118, 111
        %v1142 = vpop.permute.xlu0 %1141
        %v1143 = vsel %vm668, %v1128, %v1130
        %v1144 = vsel %vm668, %v1132, %v1134
        %v1145 = vsel %vm668, %v1136, %v1138
        %v1146 = vsel %vm668, %v1140, %v1142
        %v1159 = vadd.f32 %v1067, %v1128
        %v1160 = vadd.f32 %v1068, %v1143
        %v1161 = vadd.f32 %v1069, %v1130
        %v1162 = vadd.f32 %v1070, %v1132
        %v1163 = vadd.f32 %v1071, %v1144
        %v1164 = vadd.f32 %v1072, %v1134
        %v1165 = vadd.f32 %v1073, %v1136
        %v1166 = vadd.f32 %v1074, %v1145
        %v1167 = vadd.f32 %v1075, %v1138
        %v1168 = vadd.f32 %v1076, %v1140
        %v1169 = vadd.f32 %v1077, %v1146
        %v1170 = vadd.f32 %v1078, %v1142
        %v1171 = vld [vmem:[#allocation2 + $0x8] sm:$0xff]
        %v1172 = vld [vmem:[#allocation2 + $0x10] sm:$0xff]
        %v1173 = vld [vmem:[#allocation2 + $0x18] sm:$0xff]
        %v1174 = vld [vmem:[#allocation2 + $0x28] sm:$0xff]
        %v1175 = vld [vmem:[#allocation2 + $0x30] sm:$0xff]
        %v1176 = vld [vmem:[#allocation2 + $0x38] sm:$0xff]
        %v1177 = vld [vmem:[#allocation2 + $0x48] sm:$0xff]
        %v1178 = vld [vmem:[#allocation2 + $0x50] sm:$0xff]
        %v1179 = vld [vmem:[#allocation2 + $0x58] sm:$0xff]
        %v1180 = vld [vmem:[#allocation2 + $0x68] sm:$0xff]
        %v1181 = vld [vmem:[#allocation2 + $0x70] sm:$0xff]
        %v1182 = vld [vmem:[#allocation2 + $0x78] sm:$0xff]
        %1183 = vset.pattern.permute.xlu0 5
        %1184 = vperm.xlu0 %1183, %v602
        %v1185 = vpop.permute.xlu0 %1184
        %1187 = vset.pattern.permute.xlu0 5
        %1188 = vperm.xlu0 %1187, %v603
        %v1189 = vpop.permute.xlu0 %1188
        %1191 = vset.pattern.permute.xlu0 5
        %1192 = vperm.xlu0 %1191, %v604
        %v1193 = vpop.permute.xlu0 %1192
        %1195 = vset.pattern.permute.xlu0 5
        %1196 = vperm.xlu0 %1195, %v605
        %v1197 = vpop.permute.xlu0 %1196
        %v1199 = vmul.f32 %v1171, %v1185
        %v1200 = vmul.f32 %v1172, %v1185
        %v1201 = vmul.f32 %v1173, %v1185
        %v1202 = vmul.f32 %v1174, %v1189
        %v1203 = vmul.f32 %v1175, %v1189
        %v1204 = vmul.f32 %v1176, %v1189
        %v1205 = vmul.f32 %v1177, %v1193
        %v1206 = vmul.f32 %v1178, %v1193
        %v1207 = vmul.f32 %v1179, %v1193
        %v1208 = vmul.f32 %v1180, %v1197
        %v1209 = vmul.f32 %v1181, %v1197
        %v1210 = vmul.f32 %v1182, %v1197
        %v1211 = vlaneseq
        %v1212 = vshrl.u32 %v1211, 7
        %v1213 = vsub.s32 5, %v1212
        %v1214 = vrot.slane %v606, %v1213
        %v1215 = vlaneseq
        %v1216 = vshrl.u32 %v1215, 7
        %v1217 = vsub.s32 5, %v1216
        %v1218 = vrot.slane %v607, %v1217
        %1221 = vrot.lane.b32.xlu0 %v1214, 1
        %v1222 = vpop.permute.xlu0 %1221
        %1223 = vrot.lane.b32.xlu0 %v1218, 1
        %v1224 = vpop.permute.xlu0 %1223
        %vm1225 = vcmask 7168
        %v1226 = vsel %vm1225, %v1222, %v1224
        %v1230 = vmul.f32 %v1199, %v1222
        %v1231 = vmul.f32 %v1200, %v1226
        %v1232 = vmul.f32 %v1201, %v1224
        %v1233 = vmul.f32 %v1202, %v1222
        %v1234 = vmul.f32 %v1203, %v1226
        %v1235 = vmul.f32 %v1204, %v1224
        %v1236 = vmul.f32 %v1205, %v1222
        %v1237 = vmul.f32 %v1206, %v1226
        %v1238 = vmul.f32 %v1207, %v1224
        %v1239 = vmul.f32 %v1208, %v1222
        %v1240 = vmul.f32 %v1209, %v1226
        %v1241 = vmul.f32 %v1210, %v1224
        %1254 = vrot.lane.b32.xlu0 %v1230, 110
        %v1255 = vpop.permute.xlu0 %1254
        %1256 = vrot.lane.b32.xlu0 %v1231, 110
        %v1257 = vpop.permute.xlu0 %1256
        %1258 = vrot.lane.b32.xlu0 %v1232, 110
        %v1259 = vpop.permute.xlu0 %1258
        %1260 = vrot.lane.b32.xlu0 %v1233, 110
        %v1261 = vpop.permute.xlu0 %1260
        %1262 = vrot.lane.b32.xlu0 %v1234, 110
        %v1263 = vpop.permute.xlu0 %1262
        %1264 = vrot.lane.b32.xlu0 %v1235, 110
        %v1265 = vpop.permute.xlu0 %1264
        %1266 = vrot.lane.b32.xlu0 %v1236, 110
        %v1267 = vpop.permute.xlu0 %1266
        %1268 = vrot.lane.b32.xlu0 %v1237, 110
        %v1269 = vpop.permute.xlu0 %1268
        %1270 = vrot.lane.b32.xlu0 %v1238, 110
        %v1271 = vpop.permute.xlu0 %1270
        %1272 = vrot.lane.b32.xlu0 %v1239, 110
        %v1273 = vpop.permute.xlu0 %1272
        %1274 = vrot.lane.b32.xlu0 %v1240, 110
        %v1275 = vpop.permute.xlu0 %1274
        %1276 = vrot.lane.b32.xlu0 %v1241, 110
        %v1277 = vpop.permute.xlu0 %1276
        %vm1278 = vcmask 900096
        %v1279 = vsel %vm1278, %v1255, %v1257
        %v1280 = vsel %vm1278, %v1257, %v1259
        %v1281 = vsel %vm1278, %v1261, %v1263
        %v1282 = vsel %vm1278, %v1263, %v1265
        %v1283 = vsel %vm1278, %v1267, %v1269
        %v1284 = vsel %vm1278, %v1269, %v1271
        %v1285 = vsel %vm1278, %v1273, %v1275
        %v1286 = vsel %vm1278, %v1275, %v1277
        %v1299 = vadd.f32 %v1159, %v1255
        %v1300 = vadd.f32 %v1160, %v1279
        %v1301 = vadd.f32 %v1161, %v1280
        %v1302 = vadd.f32 %v1162, %v1261
        %v1303 = vadd.f32 %v1163, %v1281
        %v1304 = vadd.f32 %v1164, %v1282
        %v1305 = vadd.f32 %v1165, %v1267
        %v1306 = vadd.f32 %v1166, %v1283
        %v1307 = vadd.f32 %v1167, %v1284
        %v1308 = vadd.f32 %v1168, %v1273
        %v1309 = vadd.f32 %v1169, %v1285
        %v1310 = vadd.f32 %v1170, %v1286
        %1311 = vset.pattern.permute.xlu0 6
        %1312 = vperm.xlu0 %1311, %v602
        %v1313 = vpop.permute.xlu0 %1312
        %1315 = vset.pattern.permute.xlu0 6
        %1316 = vperm.xlu0 %1315, %v603
        %v1317 = vpop.permute.xlu0 %1316
        %1319 = vset.pattern.permute.xlu0 6
        %1320 = vperm.xlu0 %1319, %v604
        %v1321 = vpop.permute.xlu0 %1320
        %1323 = vset.pattern.permute.xlu0 6
        %1324 = vperm.xlu0 %1323, %v605
        %v1325 = vpop.permute.xlu0 %1324
        %v1327 = vmul.f32 %v1171, %v1313
        %v1328 = vmul.f32 %v1172, %v1313
        %v1329 = vmul.f32 %v1173, %v1313
        %v1330 = vmul.f32 %v1174, %v1317
        %v1331 = vmul.f32 %v1175, %v1317
        %v1332 = vmul.f32 %v1176, %v1317
        %v1333 = vmul.f32 %v1177, %v1321
        %v1334 = vmul.f32 %v1178, %v1321
        %v1335 = vmul.f32 %v1179, %v1321
        %v1336 = vmul.f32 %v1180, %v1325
        %v1337 = vmul.f32 %v1181, %v1325
        %v1338 = vmul.f32 %v1182, %v1325
        %v1339 = vlaneseq
        %v1340 = vshrl.u32 %v1339, 7
        %v1341 = vsub.s32 6, %v1340
        %v1342 = vrot.slane %v606, %v1341
        %v1343 = vlaneseq
        %v1344 = vshrl.u32 %v1343, 7
        %v1345 = vsub.s32 6, %v1344
        %v1346 = vrot.slane %v607, %v1345
        %1349 = vrot.lane.b32.xlu0 %v1342, 15
        %v1350 = vpop.permute.xlu0 %1349
        %1351 = vrot.lane.b32.xlu0 %v1346, 15
        %v1352 = vpop.permute.xlu0 %1351
        %vm1353 = vcmask 121856
        %v1354 = vsel %vm1353, %v1350, %v1352
        %v1358 = vmul.f32 %v1327, %v1350
        %v1359 = vmul.f32 %v1328, %v1354
        %v1360 = vmul.f32 %v1329, %v1352
        %v1361 = vmul.f32 %v1330, %v1350
        %v1362 = vmul.f32 %v1331, %v1354
        %v1363 = vmul.f32 %v1332, %v1352
        %v1364 = vmul.f32 %v1333, %v1350
        %v1365 = vmul.f32 %v1334, %v1354
        %v1366 = vmul.f32 %v1335, %v1352
        %v1367 = vmul.f32 %v1336, %v1350
        %v1368 = vmul.f32 %v1337, %v1354
        %v1369 = vmul.f32 %v1338, %v1352
        %1382 = vrot.lane.b32.xlu0 %v1358, 96
        %v1383 = vpop.permute.xlu0 %1382
        %1384 = vrot.lane.b32.xlu0 %v1359, 96
        %v1385 = vpop.permute.xlu0 %1384
        %1386 = vrot.lane.b32.xlu0 %v1360, 96
        %v1387 = vpop.permute.xlu0 %1386
        %1388 = vrot.lane.b32.xlu0 %v1361, 96
        %v1389 = vpop.permute.xlu0 %1388
        %1390 = vrot.lane.b32.xlu0 %v1362, 96
        %v1391 = vpop.permute.xlu0 %1390
        %1392 = vrot.lane.b32.xlu0 %v1363, 96
        %v1393 = vpop.permute.xlu0 %1392
        %1394 = vrot.lane.b32.xlu0 %v1364, 96
        %v1395 = vpop.permute.xlu0 %1394
        %1396 = vrot.lane.b32.xlu0 %v1365, 96
        %v1397 = vpop.permute.xlu0 %1396
        %1398 = vrot.lane.b32.xlu0 %v1366, 96
        %v1399 = vpop.permute.xlu0 %1398
        %1400 = vrot.lane.b32.xlu0 %v1367, 96
        %v1401 = vpop.permute.xlu0 %1400
        %1402 = vrot.lane.b32.xlu0 %v1368, 96
        %v1403 = vpop.permute.xlu0 %1402
        %1404 = vrot.lane.b32.xlu0 %v1369, 96
        %v1405 = vpop.permute.xlu0 %1404
        %vm1406 = vcmask 785408
        %v1407 = vsel %vm1406, %v1383, %v1385
        %v1408 = vsel %vm1406, %v1385, %v1387
        %v1409 = vsel %vm1406, %v1389, %v1391
        %v1410 = vsel %vm1406, %v1391, %v1393
        %v1411 = vsel %vm1406, %v1395, %v1397
        %v1412 = vsel %vm1406, %v1397, %v1399
        %v1413 = vsel %vm1406, %v1401, %v1403
        %v1414 = vsel %vm1406, %v1403, %v1405
        %v1427 = vadd.f32 %v1299, %v1383
        %v1428 = vadd.f32 %v1300, %v1407
        %v1429 = vadd.f32 %v1301, %v1408
        %v1430 = vadd.f32 %v1302, %v1389
        %v1431 = vadd.f32 %v1303, %v1409
        %v1432 = vadd.f32 %v1304, %v1410
        %v1433 = vadd.f32 %v1305, %v1395
        %v1434 = vadd.f32 %v1306, %v1411
        %v1435 = vadd.f32 %v1307, %v1412
        %v1436 = vadd.f32 %v1308, %v1401
        %v1437 = vadd.f32 %v1309, %v1413
        %v1438 = vadd.f32 %v1310, %v1414
        %1439 = vset.pattern.permute.xlu0 7
        %1440 = vperm.xlu0 %1439, %v602
        %v1441 = vpop.permute.xlu0 %1440
        %1443 = vset.pattern.permute.xlu0 7
        %1444 = vperm.xlu0 %1443, %v603
        %v1445 = vpop.permute.xlu0 %1444
        %1447 = vset.pattern.permute.xlu0 7
        %1448 = vperm.xlu0 %1447, %v604
        %v1449 = vpop.permute.xlu0 %1448
        %1451 = vset.pattern.permute.xlu0 7
        %1452 = vperm.xlu0 %1451, %v605
        %v1453 = vpop.permute.xlu0 %1452
        %v1455 = vmul.f32 %v1171, %v1441
        %v1456 = vmul.f32 %v1172, %v1441
        %v1457 = vmul.f32 %v1173, %v1441
        %v1458 = vmul.f32 %v1174, %v1445
        %v1459 = vmul.f32 %v1175, %v1445
        %v1460 = vmul.f32 %v1176, %v1445
        %v1461 = vmul.f32 %v1177, %v1449
        %v1462 = vmul.f32 %v1178, %v1449
        %v1463 = vmul.f32 %v1179, %v1449
        %v1464 = vmul.f32 %v1180, %v1453
        %v1465 = vmul.f32 %v1181, %v1453
        %v1466 = vmul.f32 %v1182, %v1453
        %v1467 = vlaneseq
        %v1468 = vshrl.u32 %v1467, 7
        %v1469 = vsub.s32 7, %v1468
        %v1470 = vrot.slane %v606, %v1469
        %v1471 = vlaneseq
        %v1472 = vshrl.u32 %v1471, 7
        %v1473 = vsub.s32 7, %v1472
        %v1474 = vrot.slane %v607, %v1473
        %1477 = vrot.lane.b32.xlu0 %v1470, 16
        %v1478 = vpop.permute.xlu0 %1477
        %1479 = vrot.lane.b32.xlu0 %v1474, 16
        %v1480 = vpop.permute.xlu0 %1479
        %v1481 = vsel %vm444, %v1478, %v1480
        %v1485 = vmul.f32 %v1455, %v1478
        %v1486 = vmul.f32 %v1456, %v1481
        %v1487 = vmul.f32 %v1457, %v1480
        %v1488 = vmul.f32 %v1458, %v1478
        %v1489 = vmul.f32 %v1459, %v1481
        %v1490 = vmul.f32 %v1460, %v1480
        %v1491 = vmul.f32 %v1461, %v1478
        %v1492 = vmul.f32 %v1462, %v1481
        %v1493 = vmul.f32 %v1463, %v1480
        %v1494 = vmul.f32 %v1464, %v1478
        %v1495 = vmul.f32 %v1465, %v1481
        %v1496 = vmul.f32 %v1466, %v1480
        %1509 = vrot.lane.b32.xlu0 %v1485, 95
        %v1510 = vpop.permute.xlu0 %1509
        %1511 = vrot.lane.b32.xlu0 %v1486, 95
        %v1512 = vpop.permute.xlu0 %1511
        %1513 = vrot.lane.b32.xlu0 %v1487, 95
        %v1514 = vpop.permute.xlu0 %1513
        %1515 = vrot.lane.b32.xlu0 %v1488, 95
        %v1516 = vpop.permute.xlu0 %1515
        %1517 = vrot.lane.b32.xlu0 %v1489, 95
        %v1518 = vpop.permute.xlu0 %1517
        %1519 = vrot.lane.b32.xlu0 %v1490, 95
        %v1520 = vpop.permute.xlu0 %1519
        %1521 = vrot.lane.b32.xlu0 %v1491, 95
        %v1522 = vpop.permute.xlu0 %1521
        %1523 = vrot.lane.b32.xlu0 %v1492, 95
        %v1524 = vpop.permute.xlu0 %1523
        %1525 = vrot.lane.b32.xlu0 %v1493, 95
        %v1526 = vpop.permute.xlu0 %1525
        %1527 = vrot.lane.b32.xlu0 %v1494, 95
        %v1528 = vpop.permute.xlu0 %1527
        %1529 = vrot.lane.b32.xlu0 %v1495, 95
        %v1530 = vpop.permute.xlu0 %1529
        %1531 = vrot.lane.b32.xlu0 %v1496, 95
        %v1532 = vpop.permute.xlu0 %1531
        %vm1533 = vcmask 777216
        %v1534 = vsel %vm1533, %v1510, %v1512
        %v1535 = vsel %vm1533, %v1512, %v1514
        %v1536 = vsel %vm1533, %v1516, %v1518
        %v1537 = vsel %vm1533, %v1518, %v1520
        %v1538 = vsel %vm1533, %v1522, %v1524
        %v1539 = vsel %vm1533, %v1524, %v1526
        %v1540 = vsel %vm1533, %v1528, %v1530
        %v1541 = vsel %vm1533, %v1530, %v1532
        %v1554 = vadd.f32 %v1427, %v1510
        %v1555 = vadd.f32 %v1428, %v1534
        %v1556 = vadd.f32 %v1429, %v1535
        %v1557 = vadd.f32 %v1430, %v1516
        %v1558 = vadd.f32 %v1431, %v1536
        %v1559 = vadd.f32 %v1432, %v1537
        %v1560 = vadd.f32 %v1433, %v1522
        %v1561 = vadd.f32 %v1434, %v1538
        %v1562 = vadd.f32 %v1435, %v1539
        %v1563 = vadd.f32 %v1436, %v1528
        %v1564 = vadd.f32 %v1437, %v1540
        %v1565 = vadd.f32 %v1438, %v1541
        %1566 = vset.pattern.permute.xlu0 8
        %1567 = vperm.xlu0 %1566, %v602
        %v1568 = vpop.permute.xlu0 %1567
        %1570 = vset.pattern.permute.xlu0 8
        %1571 = vperm.xlu0 %1570, %v603
        %v1572 = vpop.permute.xlu0 %1571
        %1574 = vset.pattern.permute.xlu0 8
        %1575 = vperm.xlu0 %1574, %v604
        %v1576 = vpop.permute.xlu0 %1575
        %1578 = vset.pattern.permute.xlu0 8
        %1579 = vperm.xlu0 %1578, %v605
        %v1580 = vpop.permute.xlu0 %1579
        %v1582 = vmul.f32 %v1171, %v1568
        %v1583 = vmul.f32 %v1172, %v1568
        %v1584 = vmul.f32 %v1173, %v1568
        %v1585 = vmul.f32 %v1174, %v1572
        %v1586 = vmul.f32 %v1175, %v1572
        %v1587 = vmul.f32 %v1176, %v1572
        %v1588 = vmul.f32 %v1177, %v1576
        %v1589 = vmul.f32 %v1178, %v1576
        %v1590 = vmul.f32 %v1179, %v1576
        %v1591 = vmul.f32 %v1180, %v1580
        %v1592 = vmul.f32 %v1181, %v1580
        %v1593 = vmul.f32 %v1182, %v1580
        %v1594 = vlaneseq
        %v1595 = vshrl.u32 %v1594, 7
        %v1596 = vsub.s32 0, %v1595
        %v1597 = vrot.slane %v608, %v1596
        %v1598 = vlaneseq
        %v1599 = vshrl.u32 %v1598, 7
        %v1600 = vsub.s32 0, %v1599
        %v1601 = vrot.slane %v609, %v1600
        %1604 = vrot.lane.b32.xlu0 %v1597, 17
        %v1605 = vpop.permute.xlu0 %1604
        %1606 = vrot.lane.b32.xlu0 %v1601, 17
        %v1607 = vpop.permute.xlu0 %1606
        %vm1608 = vcmask 138240
        %v1609 = vsel %vm1608, %v1605, %v1607
        %v1613 = vmul.f32 %v1582, %v1605
        %v1614 = vmul.f32 %v1583, %v1609
        %v1615 = vmul.f32 %v1584, %v1607
        %v1616 = vmul.f32 %v1585, %v1605
        %v1617 = vmul.f32 %v1586, %v1609
        %v1618 = vmul.f32 %v1587, %v1607
        %v1619 = vmul.f32 %v1588, %v1605
        %v1620 = vmul.f32 %v1589, %v1609
        %v1621 = vmul.f32 %v1590, %v1607
        %v1622 = vmul.f32 %v1591, %v1605
        %v1623 = vmul.f32 %v1592, %v1609
        %v1624 = vmul.f32 %v1593, %v1607
        %1637 = vrot.lane.b32.xlu0 %v1613, 94
        %v1638 = vpop.permute.xlu0 %1637
        %1639 = vrot.lane.b32.xlu0 %v1614, 94
        %v1640 = vpop.permute.xlu0 %1639
        %1641 = vrot.lane.b32.xlu0 %v1615, 94
        %v1642 = vpop.permute.xlu0 %1641
        %1643 = vrot.lane.b32.xlu0 %v1616, 94
        %v1644 = vpop.permute.xlu0 %1643
        %1645 = vrot.lane.b32.xlu0 %v1617, 94
        %v1646 = vpop.permute.xlu0 %1645
        %1647 = vrot.lane.b32.xlu0 %v1618, 94
        %v1648 = vpop.permute.xlu0 %1647
        %1649 = vrot.lane.b32.xlu0 %v1619, 94
        %v1650 = vpop.permute.xlu0 %1649
        %1651 = vrot.lane.b32.xlu0 %v1620, 94
        %v1652 = vpop.permute.xlu0 %1651
        %1653 = vrot.lane.b32.xlu0 %v1621, 94
        %v1654 = vpop.permute.xlu0 %1653
        %1655 = vrot.lane.b32.xlu0 %v1622, 94
        %v1656 = vpop.permute.xlu0 %1655
        %1657 = vrot.lane.b32.xlu0 %v1623, 94
        %v1658 = vpop.permute.xlu0 %1657
        %1659 = vrot.lane.b32.xlu0 %v1624, 94
        %v1660 = vpop.permute.xlu0 %1659
        %vm1661 = vcmask 769024
        %v1662 = vsel %vm1661, %v1638, %v1640
        %v1663 = vsel %vm1661, %v1640, %v1642
        %v1664 = vsel %vm1661, %v1644, %v1646
        %v1665 = vsel %vm1661, %v1646, %v1648
        %v1666 = vsel %vm1661, %v1650, %v1652
        %v1667 = vsel %vm1661, %v1652, %v1654
        %v1668 = vsel %vm1661, %v1656, %v1658
        %v1669 = vsel %vm1661, %v1658, %v1660
        %v1682 = vadd.f32 %v1554, %v1638
        %v1683 = vadd.f32 %v1555, %v1662
        %v1684 = vadd.f32 %v1556, %v1663
        %v1685 = vadd.f32 %v1557, %v1644
        %v1686 = vadd.f32 %v1558, %v1664
        %v1687 = vadd.f32 %v1559, %v1665
        %v1688 = vadd.f32 %v1560, %v1650
        %v1689 = vadd.f32 %v1561, %v1666
        %v1690 = vadd.f32 %v1562, %v1667
        %v1691 = vadd.f32 %v1563, %v1656
        %v1692 = vadd.f32 %v1564, %v1668
        %v1693 = vadd.f32 %v1565, %v1669
        %v1694 = vld [vmem:[%s4] sm:$0xff]
        %v1695 = vld [vmem:[%s4 + $0x8] sm:$0xff]
        %v1696 = vld [vmem:[%s4 + $0x10] sm:$0xff]
        %v1697 = vld [vmem:[%s4 + $0x18] sm:$0xff]
        %1699 = vset.pattern.permute.xlu0 0
        %1700 = vperm.xlu0 %1699, %v1694
        %v1701 = vpop.permute.xlu0 %1700
        %1704 = vset.pattern.permute.xlu0 0
        %1705 = vperm.xlu0 %1704, %v1695
        %v1706 = vpop.permute.xlu0 %1705
        %1709 = vset.pattern.permute.xlu0 0
        %1710 = vperm.xlu0 %1709, %v1696
        %v1711 = vpop.permute.xlu0 %1710
        %1714 = vset.pattern.permute.xlu0 0
        %1715 = vperm.xlu0 %1714, %v1697
        %v1716 = vpop.permute.xlu0 %1715
        %v1718 = vadd.f32 %v1682, %v1701
        %v1719 = vadd.f32 %v1683, %v1701
        %v1720 = vadd.f32 %v1684, %v1701
        %v1721 = vadd.f32 %v1685, %v1706
        %v1722 = vadd.f32 %v1686, %v1706
        %v1723 = vadd.f32 %v1687, %v1706
        %v1724 = vadd.f32 %v1688, %v1711
        %v1725 = vadd.f32 %v1689, %v1711
        %v1726 = vadd.f32 %v1690, %v1711
        %v1727 = vadd.f32 %v1691, %v1716
        %v1728 = vadd.f32 %v1692, %v1716
        %v1729 = vadd.f32 %v1693, %v1716
        %v1730 = vadd.f32 %v1718, 3.0
        %v1731 = vadd.f32 %v1719, 3.0
        %v1732 = vadd.f32 %v1720, 3.0
        %v1733 = vadd.f32 %v1721, 3.0
        %v1734 = vadd.f32 %v1722, 3.0
        %v1735 = vadd.f32 %v1723, 3.0
        %v1736 = vadd.f32 %v1724, 3.0
        %v1737 = vadd.f32 %v1725, 3.0
        %v1738 = vadd.f32 %v1726, 3.0
        %v1739 = vadd.f32 %v1727, 3.0
        %v1740 = vadd.f32 %v1728, 3.0
        %v1741 = vadd.f32 %v1729, 3.0
        %v1742 = vmax.f32 %v1730, 0.0
        %v1743 = vmax.f32 %v1731, 0.0
        %v1744 = vmax.f32 %v1732, 0.0
        %v1745 = vmax.f32 %v1733, 0.0
        %v1746 = vmax.f32 %v1734, 0.0
        %v1747 = vmax.f32 %v1735, 0.0
        %v1748 = vmax.f32 %v1736, 0.0
        %v1749 = vmax.f32 %v1737, 0.0
        %v1750 = vmax.f32 %v1738, 0.0
        %v1751 = vmax.f32 %v1739, 0.0
        %v1752 = vmax.f32 %v1740, 0.0
        %v1753 = vmax.f32 %v1741, 0.0
        %v1754 = vmin.f32 %v1742, 6.0
        %v1755 = vmin.f32 %v1743, 6.0
        %v1756 = vmin.f32 %v1744, 6.0
        %v1757 = vmin.f32 %v1745, 6.0
        %v1758 = vmin.f32 %v1746, 6.0
        %v1759 = vmin.f32 %v1747, 6.0
        %v1760 = vmin.f32 %v1748, 6.0
        %v1761 = vmin.f32 %v1749, 6.0
        %v1762 = vmin.f32 %v1750, 6.0
        %v1763 = vmin.f32 %v1751, 6.0
        %v1764 = vmin.f32 %v1752, 6.0
        %v1765 = vmin.f32 %v1753, 6.0
        %v1766 = vmul.f32 %v1718, %v1754
        %v1767 = vmul.f32 %v1719, %v1755
        %v1768 = vmul.f32 %v1720, %v1756
        %v1769 = vmul.f32 %v1721, %v1757
        %v1770 = vmul.f32 %v1722, %v1758
        %v1771 = vmul.f32 %v1723, %v1759
        %v1772 = vmul.f32 %v1724, %v1760
        %v1773 = vmul.f32 %v1725, %v1761
        %v1774 = vmul.f32 %v1726, %v1762
        %v1775 = vmul.f32 %v1727, %v1763
        %v1776 = vmul.f32 %v1728, %v1764
        %v1777 = vmul.f32 %v1729, %v1765
        %v1778 = vmul.f32 %v1766, 0.16666667
        %v1779 = vmul.f32 %v1767, 0.16666667
        %v1780 = vmul.f32 %v1768, 0.16666667
        %v1781 = vmul.f32 %v1769, 0.16666667
        %v1782 = vmul.f32 %v1770, 0.16666667
        %v1783 = vmul.f32 %v1771, 0.16666667
        %v1784 = vmul.f32 %v1772, 0.16666667
        %v1785 = vmul.f32 %v1773, 0.16666667
        %v1786 = vmul.f32 %v1774, 0.16666667
        %v1787 = vmul.f32 %v1775, 0.16666667
        %v1788 = vmul.f32 %v1776, 0.16666667
        %v1789 = vmul.f32 %v1777, 0.16666667
        %1802 = vrot.lane.b32.xlu0 %v1778, 17
        %v1803 = vpop.permute.xlu0 %1802
        %1804 = vrot.lane.b32.xlu0 %v1779, 17
        %v1805 = vpop.permute.xlu0 %1804
        %1806 = vrot.lane.b32.xlu0 %v1780, 17
        %v1807 = vpop.permute.xlu0 %1806
        %1808 = vrot.lane.b32.xlu0 %v1781, 17
        %v1809 = vpop.permute.xlu0 %1808
        %1810 = vrot.lane.b32.xlu0 %v1782, 17
        %v1811 = vpop.permute.xlu0 %1810
        %1812 = vrot.lane.b32.xlu0 %v1783, 17
        %v1813 = vpop.permute.xlu0 %1812
        %1814 = vrot.lane.b32.xlu0 %v1784, 17
        %v1815 = vpop.permute.xlu0 %1814
        %1816 = vrot.lane.b32.xlu0 %v1785, 17
        %v1817 = vpop.permute.xlu0 %1816
        %1818 = vrot.lane.b32.xlu0 %v1786, 17
        %v1819 = vpop.permute.xlu0 %1818
        %1820 = vrot.lane.b32.xlu0 %v1787, 17
        %v1821 = vpop.permute.xlu0 %1820
        %1822 = vrot.lane.b32.xlu0 %v1788, 17
        %v1823 = vpop.permute.xlu0 %1822
        %1824 = vrot.lane.b32.xlu0 %v1789, 17
        %v1825 = vpop.permute.xlu0 %1824
        %v1826 = vsel %vm1608, %v1803, %v1805
        %v1827 = vsel %vm1608, %v1805, %v1807
        %v1828 = vsel %vm1608, %v1809, %v1811
        %v1829 = vsel %vm1608, %v1811, %v1813
        %v1830 = vsel %vm1608, %v1815, %v1817
        %v1831 = vsel %vm1608, %v1817, %v1819
        %v1832 = vsel %vm1608, %v1821, %v1823
        %v1833 = vsel %vm1608, %v1823, %v1825
        %v1842 = vadd.f32 %v1826, %v1827
        %1843 = vadd.xlane.f32.xlu0 %v1842
        %v1844 = vpop.xlane.xlu0 %1843
        %v1845 = vadd.f32 %v1828, %v1829
        %1846 = vadd.xlane.f32.xlu0 %v1845
        %v1847 = vpop.xlane.xlu0 %1846
        %v1848 = vadd.f32 %v1830, %v1831
        %1849 = vadd.xlane.f32.xlu0 %v1848
        %v1850 = vpop.xlane.xlu0 %1849
        %v1851 = vadd.f32 %v1832, %v1833
        %1852 = vadd.xlane.f32.xlu0 %v1851
        %v1853 = vpop.xlane.xlu0 %1852
        %v1854 = vrcp.pop 256.0
        %v1855 = vmul.f32 %v1844, %v1854
        %v1856 = vmul.f32 %v1847, %v1854
        %v1857 = vmul.f32 %v1850, %v1854
        %v1858 = vmul.f32 %v1853, %v1854
        %v1859 = vld [vmem:[%s6] sm:$0xff]
        %v1860 = vld [vmem:[%s6 + $0x8] sm:$0xff]
        %v1861 = vld [vmem:[%s6 + $0x10] sm:$0xff]
        %v1862 = vld [vmem:[%s6 + $0x18] sm:$0xff]
        %v1863 = vmul.f32 %v1855, %v1859
        %v1864 = vmul.f32 %v1856, %v1860
        %v1865 = vmul.f32 %v1857, %v1861
        %v1866 = vmul.f32 %v1858, %v1862
        %vm1867 = vcmask 64512
        %v1868 = vsel %vm1867, %v1863, 0.0
        %v1869 = vsel %vm1867, %v1864, 0.0
        %v1870 = vadd.f32 %v1868, %v1869
        %v1871 = vsel %vm1867, %v1865, 0.0
        %v1872 = vadd.f32 %v1870, %v1871
        %v1873 = vsel %vm1867, %v1866, 0.0
        %v1874 = vadd.f32 %v1872, %v1873
        %v1875 = vrot.slane %v1874, 4
        %v1876 = vadd.f32 %v1874, %v1875
        %v1877 = vrot.slane %v1876, 2
        %v1878 = vadd.f32 %v1876, %v1877
        %v1879 = vrot.slane %v1878, 1
        %v1880 = vadd.f32 %v1878, %v1879
        %v1881 = vld [vmem:[%s7] sm:$0x1]
        %v1882 = vadd.f32 %v1880, %v1881
        %v1883 = vmax.f32 %v1882, 0.0
        %v1884 = vld [vmem:[%s8] sm:$0xff]
        %v1885 = vld [vmem:[%s8 + $0x8] sm:$0xff]
        %v1886 = vld [vmem:[%s8 + $0x10] sm:$0xff]
        %v1887 = vld [vmem:[%s8 + $0x18] sm:$0xff]
        %v1888 = vlaneseq
        %v1889 = vshrl.u32 %v1888, 7
        %v1890 = vsub.s32 0, %v1889
        %v1891 = vrot.slane %v1883, %v1890
        %v1892 = vmul.f32 %v1891, %v1884
        %v1893 = vmul.f32 %v1891, %v1885
        %v1894 = vmul.f32 %v1891, %v1886
        %v1895 = vmul.f32 %v1891, %v1887
        %v1896 = vsel %vm1867, %v1892, 0.0
        %1897 = vadd.xlane.f32.xlu0 %v1896
        %v1898 = vpop.xlane.xlu0 %1897
        %v1899 = vsel %vm1867, %v1893, 0.0
        %1900 = vadd.xlane.f32.xlu0 %v1899
        %v1901 = vpop.xlane.xlu0 %1900
        %v1902 = vsel %vm1867, %v1894, 0.0
        %1903 = vadd.xlane.f32.xlu0 %v1902
        %v1904 = vpop.xlane.xlu0 %1903
        %v1905 = vsel %vm1867, %v1895, 0.0
        %1906 = vadd.xlane.f32.xlu0 %v1905
        %v1907 = vpop.xlane.xlu0 %1906
        %v1908 = vld [vmem:[%s9] sm:$0xff]
        %v1909 = vld [vmem:[%s9 + $0x8] sm:$0xff]
        %v1910 = vld [vmem:[%s9 + $0x10] sm:$0xff]
        %v1911 = vld [vmem:[%s9 + $0x18] sm:$0xff]
        %v1912 = vadd.f32 %v1898, %v1908
        %v1913 = vadd.f32 %v1901, %v1909
        %v1914 = vadd.f32 %v1904, %v1910
        %v1915 = vadd.f32 %v1907, %v1911
        %v1916 = vsub.f32 0.0, %v1912
        %v1917 = vsub.f32 0.0, %v1913
        %v1918 = vsub.f32 0.0, %v1914
        %v1919 = vsub.f32 0.0, %v1915
        %v1920 = vmul.f32 %v1916, 1.442695
        %v1921 = vpow.pop %v1920
        %v1922 = vmul.f32 %v1917, 1.442695
        %v1923 = vpow.pop %v1922
        %v1924 = vmul.f32 %v1918, 1.442695
        %v1925 = vpow.pop %v1924
        %v1926 = vmul.f32 %v1919, 1.442695
        %v1927 = vpow.pop %v1926
        %v1928 = vadd.f32 %v1921, 1.0
        %v1929 = vadd.f32 %v1923, 1.0
        %v1930 = vadd.f32 %v1925, 1.0
        %v1931 = vadd.f32 %v1927, 1.0
        %v1932 = vrcp.pop %v1928
        %v1933 = vmul.f32 1.0, %v1932
        %v1934 = vrcp.pop %v1929
        %v1935 = vmul.f32 1.0, %v1934
        %v1936 = vrcp.pop %v1930
        %v1937 = vmul.f32 1.0, %v1936
        %v1938 = vrcp.pop %v1931
        %v1939 = vmul.f32 1.0, %v1938
        %1941 = vset.pattern.permute.xlu0 0
        %1942 = vperm.xlu0 %1941, %v1933
        %v1943 = vpop.permute.xlu0 %1942
        %1946 = vset.pattern.permute.xlu0 0
        %1947 = vperm.xlu0 %1946, %v1935
        %v1948 = vpop.permute.xlu0 %1947
        %1951 = vset.pattern.permute.xlu0 0
        %1952 = vperm.xlu0 %1951, %v1937
        %v1953 = vpop.permute.xlu0 %1952
        %1956 = vset.pattern.permute.xlu0 0
        %1957 = vperm.xlu0 %1956, %v1939
        %v1958 = vpop.permute.xlu0 %1957
        %v1960 = vmul.f32 %v1778, %v1943
        %v1961 = vmul.f32 %v1779, %v1943
        %v1962 = vmul.f32 %v1780, %v1943
        %v1963 = vmul.f32 %v1781, %v1948
        %v1964 = vmul.f32 %v1782, %v1948
        %v1965 = vmul.f32 %v1783, %v1948
        %v1966 = vmul.f32 %v1784, %v1953
        %v1967 = vmul.f32 %v1785, %v1953
        %v1968 = vmul.f32 %v1786, %v1953
        %v1969 = vmul.f32 %v1787, %v1958
        %v1970 = vmul.f32 %v1788, %v1958
        %v1971 = vmul.f32 %v1789, %v1958
        %v1972 = vld [vmem:[%s10] sm:$0xff]
        %v1973 = vld [vmem:[%s10 + $0x8] sm:$0xff]
        %v1974 = vld [vmem:[%s11] sm:$0xff]
        %v1975 = vld [vmem:[%s11 + $0x8] sm:$0xff]
        %1977 = vset.pattern.permute.xlu0 0
        %1978 = vperm.xlu0 %1977, %v1974
        %v1979 = vpop.permute.xlu0 %1978
        %1982 = vset.pattern.permute.xlu0 0
        %1983 = vperm.xlu0 %1982, %v1975
        %v1984 = vpop.permute.xlu0 %1983
        %1998 = vrot.lane.b32.xlu0 %v1960, 17
        %v1999 = vpop.permute.xlu0 %1998
        %2000 = vrot.lane.b32.xlu0 %v1961, 17
        %v2001 = vpop.permute.xlu0 %2000
        %2002 = vrot.lane.b32.xlu0 %v1962, 17
        %v2003 = vpop.permute.xlu0 %2002
        %2004 = vrot.lane.b32.xlu0 %v1963, 17
        %v2005 = vpop.permute.xlu0 %2004
        %2006 = vrot.lane.b32.xlu0 %v1964, 17
        %v2007 = vpop.permute.xlu0 %2006
        %2008 = vrot.lane.b32.xlu0 %v1965, 17
        %v2009 = vpop.permute.xlu0 %2008
        %2010 = vrot.lane.b32.xlu0 %v1966, 17
        %v2011 = vpop.permute.xlu0 %2010
        %2012 = vrot.lane.b32.xlu0 %v1967, 17
        %v2013 = vpop.permute.xlu0 %2012
        %2014 = vrot.lane.b32.xlu0 %v1968, 17
        %v2015 = vpop.permute.xlu0 %2014
        %2016 = vrot.lane.b32.xlu0 %v1969, 17
        %v2017 = vpop.permute.xlu0 %2016
        %2018 = vrot.lane.b32.xlu0 %v1970, 17
        %v2019 = vpop.permute.xlu0 %2018
        %2020 = vrot.lane.b32.xlu0 %v1971, 17
        %v2021 = vpop.permute.xlu0 %2020
        %v2022 = vsel %vm1608, %v1999, %v2001
        %v2023 = vsel %vm1608, %v2001, %v2003
        %v2024 = vsel %vm1608, %v2005, %v2007
        %v2025 = vsel %vm1608, %v2007, %v2009
        %v2026 = vsel %vm1608, %v2011, %v2013
        %v2027 = vsel %vm1608, %v2013, %v2015
        %v2028 = vsel %vm1608, %v2017, %v2019
        %v2029 = vsel %vm1608, %v2019, %v2021
        %vm2038 = vcmask 261120
        %v2040 = vsel %vm2038, %v1972, 0
        %v2043 = vsel %vm2038, %v1973, 0
        %2045 = vmatprep.subr.mxu0 %v2023
        %2046 = vmatpush1.msra.mxu0 %v2022
        %2047 = vmatprep.subr.mxu0 %v2025
        %2048 = vmatpush1.msra.mxu0 %v2024
        %2049 = vmatprep.subr.mxu0 %v2027
        %2050 = vmatpush1.msra.mxu0 %v2026
        %2051 = vmatprep.subr.mxu0 %v2029
        %2052 = vmatpush1.msra.mxu0 %v2028
        %2053 = vmatprep.subr.mxu0 0.0
        %2054 = vmatpush1.msra.mxu0 0.0
        %2055 = vmatprep.subr.mxu0 0.0
        %2056 = vmatpush1.msra.mxu0 0.0
        %2057 = vmatprep.subr.mxu0 0.0
        %2058 = vmatpush1.msra.mxu0 0.0
        %2059 = vmatprep.subr.mxu0 0.0
        %2060 = vmatpush1.msra.mxu0 0.0
        %2061 = vmatprep.subr.mxu0 0.0
        %2062 = vmatpush1.msra.mxu0 0.0
        %2063 = vmatprep.subr.mxu0 0.0
        %2064 = vmatpush1.msra.mxu0 0.0
        %2065 = vmatprep.subr.mxu0 0.0
        %2066 = vmatpush1.msra.mxu0 0.0
        %2067 = vmatprep.subr.mxu0 0.0
        %2068 = vmatpush1.msra.mxu0 0.0
        %2069 = vmatprep.subr.mxu0 0.0
        %2070 = vmatpush1.msra.mxu0 0.0
        %2071 = vmatprep.subr.mxu0 0.0
        %2072 = vmatpush1.msra.mxu0 0.0
        %2073 = vmatprep.subr.mxu0 0.0
        %2074 = vmatpush1.msra.mxu0 0.0
        %2075 = vmatprep.subr.mxu0 0.0
        %2076 = vmatpush1.msra.mxu0 0.0
        %2077 = vmatprep.subr.mxu0 0.0
        %2078 = vmatpush1.msra.mxu0 0.0
        %2079 = vmatprep.subr.mxu0 0.0
        %2080 = vmatpush1.msra.mxu0 0.0
        %2081 = vmatprep.subr.mxu0 0.0
        %2082 = vmatpush1.msra.mxu0 0.0
        %2083 = vmatprep.subr.mxu0 0.0
        %2084 = vmatpush1.msra.mxu0 0.0
        %2085 = vmatprep.subr.mxu0 0.0
        %2086 = vmatpush1.msra.mxu0 0.0
        %2087 = vmatprep.subr.mxu0 0.0
        %2088 = vmatpush1.msra.mxu0 0.0
        %2089 = vmatprep.subr.mxu0 0.0
        %2090 = vmatpush1.msra.mxu0 0.0
        %2091 = vmatprep.subr.mxu0 0.0
        %2092 = vmatpush1.msra.mxu0 0.0
        %2093 = vmatprep.subr.mxu0 0.0
        %2094 = vmatpush1.msra.mxu0 0.0
        %2095 = vmatprep.subr.mxu0 0.0
        %2096 = vmatpush1.msra.mxu0 0.0
        %2097 = vmatprep.subr.mxu0 0.0
        %2098 = vmatpush1.msra.mxu0 0.0
        %2099 = vmatprep.subr.mxu0 0.0
        %2100 = vmatpush1.msra.mxu0 0.0
        %2101 = vmatprep.subr.mxu0 0.0
        %2102 = vmatpush1.msra.mxu0 0.0
        %2103 = vmatprep.subr.mxu0 0.0
        %2104 = vmatpush1.msra.mxu0 0.0
        %2105 = vmatprep.subr.mxu0 0.0
        %2106 = vmatpush1.msra.mxu0 0.0
        %2107 = vmatprep.subr.mxu0 0.0
        %2108 = vmatpush1.msra.mxu0 0.0
        %2109 = vmatprep.mubr.f32.mxu0 0.0
        %2110 = vmatmul.mubr.f32.gmra.mrb[0].mxu0 %v2040
        %v2111 = vpop.f32.mrb[0].mxu0
        %v2112 = vadd.f32 %v1979, %v2111
        %v2113 = vpop.f32.mrb[0].mxu0
        %v2114 = vadd.f32 %v1979, %v2113
        %2115 = vmatprep.mubr.f32.mxu0 0.0
        %2116 = vmatmul.mubr.f32.gmra.mrb[0].mxu0 %v2043
        %v2117 = vpop.f32.mrb[0].mxu0
        %v2118 = vadd.f32 %v1984, %v2117
        %v2119 = vpop.f32.mrb[0].mxu0
        %v2120 = vadd.f32 %v1984, %v2119
        %2121 = vdwg.mxu0
        %v2122 = vadd.f32 %v2112, %v412
        %v2123 = vadd.f32 %v2114, %v413
        %v2124 = vadd.f32 %v2118, %v414
        %v2125 = vadd.f32 %v2120, %v415
        %2126 = vst [vmem:[%s406] sm:$0xff] %v2122
        %2127 = vst [vmem:[%s406 + $0x8] sm:$0xff] %v2123
        %2128 = vst [vmem:[%s406 + $0x10] sm:$0xff] %v2124
        %2129 = vst [vmem:[%s406 + $0x18] sm:$0xff] %v2125
        %s2130 = sand.u32 %s291, 1
        %s2131 = scalar_lea.sflag [#allocation4], %s2130
        %s2132 = sand.u32 %s291, 1
        %s2133 = smul.addr %s2132, 32
        %s2134 = scalar_lea.vmem [#allocation3], %s2133
        // Predicated region
        $region69: #{tpu_custom_call.1} parent=67 // pred_check
          %p2135 = pneg %p301
        $region70: #{tpu_custom_call.1} parent=67 // pred_check_branch
          %2137 = sbr.rel (%p2135) target = $region72
        $region71: #{tpu_custom_call.1} parent=67 // pred_region
          %s2139 = ssub.s32 512, 512
          %2140 = vsyncadd %s2131, %s2139
          %s2141 = smul.addr %s26, 4
          %s2142 = smul.addr %s2141, 128
          %s2143 = scalar_lea.hbm %s12, %s2142
          %s2144 = sshll.u32 %s2134, 4
          %s2145 = int_to_ptr.vmem [resolvable:$true] %s2144
          %2150 = dma.vmem_to_hbm [thread:$0]  %s2145, 512, %s2143, %s2131, 256, 256, 16
        $region72: #{tpu_custom_call.1} parent=67 // pred_fallthru
          _
      $region68: #{tpu_custom_call.1} parent=5 // pred_fallthru
        _
      %p2151 = scmp.le.s32.totalorder 2, %s21
      // Predicated region
      $region73: #{tpu_custom_call.1} parent=5 // pred_check
        %p2152 = pneg %p2151
      $region74: #{tpu_custom_call.1} parent=5 // pred_check_branch
        %2154 = sbr.rel (%p2152) target = $region76
      $region75: #{tpu_custom_call.1} parent=5 // pred_region
        %s2155 = ssub.s32 %s21, 2
        // Predicated region
        $region77: #{tpu_custom_call.1} parent=75 // pred_check
          %p2156 = pneg %p307
        $region78: #{tpu_custom_call.1} parent=75 // pred_check_branch
          %2158 = sbr.rel (%p2156) target = $region80
        $region79: #{tpu_custom_call.1} parent=75 // pred_region
          %s2159 = sand.u32 %s292, 1
          %s2160 = scalar_lea.sflag [#allocation4], %s2159
          %s2161 = sand.u32 %s292, 1
          %s2162 = smul.addr %s2161, 32
          %s2163 = scalar_lea.vmem [#allocation3], %s2162
          %2164 = dma.done %s2160, 512
        $region80: #{tpu_custom_call.1} parent=75 // pred_fallthru
          _
      $region76: #{tpu_custom_call.1} parent=5 // pred_fallthru
        _
    $region6: #{tpu_custom_call.1} parent=1 // loop_footer
      %s25 = sadd.s32 1, %s21
    $region7: #{tpu_custom_call.1} parent=1 // loop_footer_branch
      %20 = sbr.rel target = $region3
    $region8: #{tpu_custom_call.1} parent=1 // loop_exit
      _
    %2165 = vsyncpa [#allocation4], 1
    %s2166 = scalar_lea.sflag [#allocation4], 1
    %2167 = vsyncpa %s2166, 1

</llo_original>
